<compile_context>
chip_gen: v6e
topology: v6e:2x2x1
jax: 0.10.0
libtpu: 0.0.40
codegen_flags: <defaults>
</compile_context>

<pallas_src>
import functools

import jax
import jax.numpy as jnp
from jax.experimental import pallas as pl
from jax.experimental.pallas import tpu as pltpu

INPUT_DIM = 128
HIDDEN_DIM = 64
OUTPUT_DIM = 7
OUT_PAD = 128  # lane-dense padded output width


def _round_up(x, m):
    return ((x + m - 1) // m) * m


def _prep_weights(params, phase1_bf16):
    """Pack / pre-scale weights once, outside the kernel.

    * g-gate (tanh) columns of every gate weight/bias are scaled by 2 so the
      kernel can use a single sigmoid pass (tanh(x) = 2*sigmoid(2x) - 1).
    * layer-2 ih/hh and layer-1 hh are packed into one (2H, 8H) block weight:
        cols 0:4H  = [wih1; whh1]   -> gates2(t)
        cols 4H:8H = [whh0; 0    ]  -> h1(t) @ whh0 (layer-1 recurrent, t+1)
      (gate order [i, f, g, o] is preserved inside each 4H half).
    """
    H = HIDDEN_DIM

    def scale_g(w):
        return w.at[..., 2 * H:3 * H].multiply(2.0)

    wih0 = scale_g(params["wih0"])          # (D, 4H)
    whh0 = scale_g(params["whh0"])          # (H, 4H)
    wih1 = scale_g(params["wih1"])          # (H, 4H)
    whh1 = scale_g(params["whh1"])          # (H, 4H)
    b0 = scale_g(params["b0"])              # (1, 4H)
    b1 = scale_g(params["b1"])              # (1, 4H)

    top = jnp.concatenate([wih1, whh0], axis=1)                       # (H, 8H)
    bot = jnp.concatenate([whh1, jnp.zeros((H, 4 * H), jnp.float32)], axis=1)
    w_comb = jnp.concatenate([top, bot], axis=0)                      # (2H, 8H)

    wfc_pad = jnp.pad(params["wfc"], ((0, 0), (0, OUT_PAD - OUTPUT_DIM)))
    bfc_pad = jnp.pad(params["bfc"], ((0, 0), (0, OUT_PAD - OUTPUT_DIM)))

    if phase1_bf16:
        wih0 = wih0.astype(jnp.bfloat16)

    return wih0, b0, w_comb, b1, wfc_pad, bfc_pad


def _lstm_kernel(x_ref, wih0_ref, b0_ref, wcomb_ref, b1_ref, wfc_ref, bfc_ref,
                 out_ref, gx_ref, *, T, BT, unroll):
    H = HIDDEN_DIM

    # ---- Phase 1: layer-1 input projection for all timesteps (one matmul).
    x2d = x_ref[...].reshape(T * BT, INPUT_DIM)
    gx = jnp.dot(x2d, wih0_ref[...], preferred_element_type=jnp.float32)
    gx_ref[...] = (gx + b0_ref[...]).reshape(T, BT, 4 * H)

    # ---- Hoisted loop constants (broadcast_in_dim is not CSE'd by JAX).
    col = jax.lax.broadcasted_iota(jnp.int32, (BT, 4 * H), 1)
    is_g = jnp.logical_and(col >= 2 * H, col < 3 * H)
    act_scale = jnp.where(is_g, 2.0, 1.0)   # g cols were pre-scaled by 2, so
    act_shift = jnp.where(is_g, -1.0, 0.0)  # 2*sigmoid(2x) - 1 == tanh(x)
    b1_b = jnp.broadcast_to(b1_ref[...], (BT, 4 * H))

    def activate(gates):
        # Single EUP sigmoid pass over the whole (BT, 4H) block + one VPU FMA.
        return jax.nn.sigmoid(gates) * act_scale + act_shift

    def cell_tail(a, c):
        i, f = a[:, 0 * H:1 * H], a[:, 1 * H:2 * H]
        g, o = a[:, 2 * H:3 * H], a[:, 3 * H:4 * H]
        c_new = f * c + i * g
        h_new = o * jnp.tanh(c_new)
        return h_new, c_new

    def step(t, carry):
        rec1, c1, h2, c2 = carry            # rec1 = h1(t-1) @ whh0
        # Layer 1: precomputed x-gates + carried recurrent term (no matmul).
        h1n, c1n = cell_tail(activate(gx_ref[t] + rec1), c1)
        # ONE fused matmul: gates2(t) in lanes 0:4H, next-step layer-1
        # recurrent term in lanes 4H:8H.
        comb = jnp.dot(jnp.concatenate([h1n, h2], axis=1), wcomb_ref[...],
                       preferred_element_type=jnp.float32)          # (BT, 8H)
        rec1n = comb[:, 4 * H:8 * H]
        h2n, c2n = cell_tail(activate(comb[:, 0:4 * H] + b1_b), c2)
        return (rec1n, c1n, h2n, c2n)

    zeros_g = jnp.zeros((BT, 4 * H), jnp.float32)
    zeros_h = jnp.zeros((BT, H), jnp.float32)
    _, _, h2_fin, _ = jax.lax.fori_loop(
        0, T, step, (zeros_g, zeros_h, zeros_h, zeros_h), unroll=unroll)

    # fc head on the final hidden state; lane-dense (BT, 128) store.
    out_ref[...] = (
        jnp.dot(h2_fin, wfc_ref[...], preferred_element_type=jnp.float32)
        + bfc_ref[...]
    ).astype(out_ref.dtype)


def emotion_lstm_forward(x_btd, params, *, batch_tile=None, phase1_bf16=False):
    """x_btd: (B, T, D) float32 (batch_first, like the PyTorch module)."""
    B, T, D = x_btd.shape
    H = HIDDEN_DIM
    assert D == INPUT_DIM

    Bp = _round_up(B, 8)
    if batch_tile is None:
        BT = min(Bp, 128)
    else:
        assert batch_tile % 8 == 0
        BT = batch_tile
    Bp = _round_up(Bp, BT)
    n_btiles = Bp // BT

    # Time-major + batch-padded so per-step slices are sublane-aligned.
    x_tbd = jnp.transpose(x_btd, (1, 0, 2))                 # (T, B, D)
    x_tbd = jnp.pad(x_tbd, ((0, 0), (0, Bp - B), (0, 0)))   # (T, Bp, D)
    if phase1_bf16:
        x_tbd = x_tbd.astype(jnp.bfloat16)

    wih0, b0, w_comb, b1, wfc_pad, bfc_pad = _prep_weights(params, phase1_bf16)

    # Full unroll only for short sequences (avoid vreg-pressure cliff).
    unroll = True if T <= 16 else 4

    # VMEM budget with headroom (scoped default is only 16/32 MiB).
    xbytes = 2 if phase1_bf16 else 4
    est = (2 * T * BT * D * xbytes                      # double-buffered x blk
           + T * BT * 4 * H * 4                         # gx scratch
           + 2 * (D * 4 * H * xbytes + 2 * H * 8 * H * 4 + H * OUT_PAD * 4
                  + 3 * 4 * H * 4 + OUT_PAD * 4)        # weights / biases
           + 2 * BT * OUT_PAD * 4)                      # output block
    vmem_limit = int(min(max(2 * est + (4 << 20), 32 << 20), 96 << 20))

    kernel = functools.partial(_lstm_kernel, T=T, BT=BT, unroll=unroll)

    out_pad = pl.pallas_call(
        kernel,
        out_shape=jax.ShapeDtypeStruct((Bp, OUT_PAD), jnp.float32),
        grid_spec=pltpu.PrefetchScalarGridSpec(
            num_scalar_prefetch=0,
            grid=(n_btiles,),
            in_specs=[
                pl.BlockSpec((T, BT, D), lambda b: (0, b, 0)),        # x
                pl.BlockSpec((D, 4 * H), lambda b: (0, 0)),           # wih0
                pl.BlockSpec((1, 4 * H), lambda b: (0, 0)),           # b0
                pl.BlockSpec((2 * H, 8 * H), lambda b: (0, 0)),       # w_comb
                pl.BlockSpec((1, 4 * H), lambda b: (0, 0)),           # b1
                pl.BlockSpec((H, OUT_PAD), lambda b: (0, 0)),         # wfc
                pl.BlockSpec((1, OUT_PAD), lambda b: (0, 0)),         # bfc
            ],
            out_specs=pl.BlockSpec((BT, OUT_PAD), lambda b: (b, 0)),
            scratch_shapes=[pltpu.VMEM((T, BT, 4 * H), jnp.float32)],
        ),
        compiler_params=pltpu.CompilerParams(
            dimension_semantics=("parallel",),
            vmem_limit_bytes=vmem_limit,
        ),
    )(x_tbd, wih0, b0, w_comb, b1, wfc_pad, bfc_pad)

    return out_pad[:B, :OUTPUT_DIM]


def init_params(key):
    """Deterministic PyTorch-style init: U(-1/sqrt(H), 1/sqrt(H))."""
    H, D, O = HIDDEN_DIM, INPUT_DIM, OUTPUT_DIM
    bound = 1.0 / jnp.sqrt(jnp.float32(H))
    ks = jax.random.split(key, 10)
    u = lambda k, shape: jax.random.uniform(
        k, shape, jnp.float32, minval=-bound, maxval=bound)
    # Weights stored transposed (in_features, 4H) so the kernel does x @ W.
    return {
        "wih0": u(ks[0], (D, 4 * H)),
        "whh0": u(ks[1], (H, 4 * H)),
        "b0": u(ks[2], (1, 4 * H)) + u(ks[3], (1, 4 * H)),  # b_ih_l0 + b_hh_l0
        "wih1": u(ks[4], (H, 4 * H)),
        "whh1": u(ks[5], (H, 4 * H)),
        "b1": u(ks[6], (1, 4 * H)) + u(ks[7], (1, 4 * H)),  # b_ih_l1 + b_hh_l1
        "wfc": u(ks[8], (H, O)),
        "bfc": u(ks[9], (1, O)),
    }


def emotion_lstm_ref(x_btd, params):
    """Pure-JAX reference matching torch.nn.LSTM(batch_first) + Linear."""
    B, T, D = x_btd.shape
    H = HIDDEN_DIM

    def cell(x_in, h, c, wih, whh, b):
        gates = x_in @ wih + h @ whh + b
        i = jax.nn.sigmoid(gates[:, 0 * H:1 * H])
        f = jax.nn.sigmoid(gates[:, 1 * H:2 * H])
        g = jnp.tanh(gates[:, 2 * H:3 * H])
        o = jax.nn.sigmoid(gates[:, 3 * H:4 * H])
        c_new = f * c + i * g
        h_new = o * jnp.tanh(c_new)
        return h_new, c_new

    h1 = c1 = h2 = c2 = jnp.zeros((B, H), jnp.float32)
    for t in range(T):
        xt = x_btd[:, t, :]
        h1, c1 = cell(xt, h1, c1, params["wih0"], params["whh0"], params["b0"])
        h2, c2 = cell(h1, h2, c2, params["wih1"], params["whh1"], params["b1"])
    return h2 @ params["wfc"] + params["bfc"]


if __name__ == "__main__":
    key = jax.random.PRNGKey(0)
    k_x, k_x2, k_p = jax.random.split(key, 3)

    params = init_params(k_p)

    # Small shapes consistent with the module: batch=4, seq=8, input_dim=128.
    B, T = 4, 8
    x = jax.random.normal(k_x, (B, T, INPUT_DIM), jnp.float32)

    out = jax.block_until_ready(emotion_lstm_forward(x, params))
    ref = jax.block_until_ready(emotion_lstm_ref(x, params))
    assert out.shape == (B, OUTPUT_DIM)
    assert jnp.allclose(out, ref, atol=1e-4, rtol=1e-4), (
        f"f32 max abs err {jnp.max(jnp.abs(out - ref))}")

    # Multi-tile batch: exercises the 'parallel' batch grid (megacore on v7x).
    B2 = 12
    x2 = jax.random.normal(k_x2, (B2, T, INPUT_DIM), jnp.float32)
    out2 = jax.block_until_ready(
        emotion_lstm_forward(x2, params, batch_tile=8))
    ref2 = jax.block_until_ready(emotion_lstm_ref(x2, params))
    assert out2.shape == (B2, OUTPUT_DIM)
    assert jnp.allclose(out2, ref2, atol=1e-4, rtol=1e-4), (
        f"grid max abs err {jnp.max(jnp.abs(out2 - ref2))}")

    # bf16 Phase-1 input projection (MXU-native on v6e/v7x); recurrence is f32.
    out3 = jax.block_until_ready(
        emotion_lstm_forward(x, params, phase1_bf16=True))
    assert jnp.allclose(out3, ref, atol=5e-2, rtol=5e-2), (
        f"bf16 max abs err {jnp.max(jnp.abs(out3 - ref))}")

    print("KERNEL_OK")
</pallas_src>

<mosaic_0001>
module attributes {stable_mosaic.version = 11 : i64} {
  func.func @_lstm_kernel(%arg0: i32, %arg1: memref<8x8x128xf32, #tpu.memory_space<vmem>>, %arg2: memref<128x256xf32, #tpu.memory_space<vmem>>, %arg3: memref<1x256xf32, #tpu.memory_space<vmem>>, %arg4: memref<128x512xf32, #tpu.memory_space<vmem>>, %arg5: memref<1x256xf32, #tpu.memory_space<vmem>>, %arg6: memref<64x128xf32, #tpu.memory_space<vmem>>, %arg7: memref<1x128xf32, #tpu.memory_space<vmem>>, %arg8: memref<8x128xf32, #tpu.memory_space<vmem>>, %arg9: memref<8x8x256xf32, #tpu.memory_space<vmem>>) attributes {dimension_semantics = [#tpu.dimension_semantics<parallel>], iteration_bounds = array<i64: 1>, scalar_prefetch = 0 : i64, scratch_operands = 1 : i64, tpu.core_type = #tpu.core_type<tc>, window_params = [{transform_indices = @transform_0, window_bounds = array<i64: 8, 8, 128>}, {pipeline_mode = #tpu.pipeline_mode<synchronous>, transform_indices = @transform_1, window_bounds = array<i64: 128, 256>}, {pipeline_mode = #tpu.pipeline_mode<synchronous>, transform_indices = @transform_2, window_bounds = array<i64: 1, 256>}, {pipeline_mode = #tpu.pipeline_mode<synchronous>, transform_indices = @transform_3, window_bounds = array<i64: 128, 512>}, {pipeline_mode = #tpu.pipeline_mode<synchronous>, transform_indices = @transform_4, window_bounds = array<i64: 1, 256>}, {pipeline_mode = #tpu.pipeline_mode<synchronous>, transform_indices = @transform_5, window_bounds = array<i64: 64, 128>}, {pipeline_mode = #tpu.pipeline_mode<synchronous>, transform_indices = @transform_6, window_bounds = array<i64: 1, 128>}, {transform_indices = @transform_7, window_bounds = array<i64: 8, 128>}]} {
    %c0 = arith.constant 0 : index
    %c0_0 = arith.constant 0 : index
    %c0_1 = arith.constant 0 : index
    %0 = vector.load %arg1[%c0, %c0_0, %c0_1] : memref<8x8x128xf32, #tpu.memory_space<vmem>>, vector<8x8x128xf32>
    %1 = vector.shape_cast %0 : vector<8x8x128xf32> to vector<64x128xf32>
    %c0_2 = arith.constant 0 : index
    %c0_3 = arith.constant 0 : index
    %2 = vector.load %arg2[%c0_2, %c0_3] : memref<128x256xf32, #tpu.memory_space<vmem>>, vector<128x256xf32>
    %cst = arith.constant dense<0.000000e+00> : vector<64x256xf32>
    %3 = tpu.matmul %1, %2, %cst {dimension_numbers = #tpu.dot_dimension_numbers<[1], [0], [0], [1], [0, 0, 1, 1], [], []>} : vector<64x128xf32>, vector<128x256xf32>, vector<64x256xf32> -> vector<64x256xf32>
    %c0_4 = arith.constant 0 : index
    %c0_5 = arith.constant 0 : index
    %4 = vector.load %arg3[%c0_4, %c0_5] : memref<1x256xf32, #tpu.memory_space<vmem>>, vector<1x256xf32>
    %5 = vector.broadcast %4 : vector<1x256xf32> to vector<64x256xf32>
    %6 = arith.addf %3, %5 : vector<64x256xf32>
    %7 = vector.shape_cast %6 : vector<64x256xf32> to vector<8x8x256xf32>
    %c0_6 = arith.constant 0 : index
    %c0_7 = arith.constant 0 : index
    %c0_8 = arith.constant 0 : index
    %8 = vector.load %arg9[%c0_6, %c0_7, %c0_8] : memref<8x8x256xf32, #tpu.memory_space<vmem>>, vector<8x8x256xf32>
    tpu.vector_store %arg9[%c0_6, %c0_7, %c0_8], %7 {strides = array<i32>} : memref<8x8x256xf32, #tpu.memory_space<vmem>>, vector<8x8x256xf32>,
    %9 = tpu.iota {dimensions = array<i32: 1>} : vector<8x256xi32>
    %c128_i32 = arith.constant 128 : i32
    %10 = vector.broadcast %c128_i32 : i32 to vector<8x256xi32>
    %11 = arith.cmpi sge, %9, %10 : vector<8x256xi32>
    %c192_i32 = arith.constant 192 : i32
    %12 = vector.broadcast %c192_i32 : i32 to vector<8x256xi32>
    %13 = arith.cmpi slt, %9, %12 : vector<8x256xi32>
    %14 = arith.andi %11, %13 : vector<8x256xi1>
    %cst_9 = arith.constant 2.000000e+00 : f32
    %cst_10 = arith.constant 1.000000e+00 : f32
    %15 = vector.broadcast %cst_9 : f32 to vector<8x256xf32>
    %16 = vector.broadcast %cst_10 : f32 to vector<8x256xf32>
    %17 = arith.select %14, %15, %16 : vector<8x256xi1>, vector<8x256xf32>
    %cst_11 = arith.constant -1.000000e+00 : f32
    %cst_12 = arith.constant 0.000000e+00 : f32
    %18 = vector.broadcast %cst_11 : f32 to vector<8x256xf32>
    %19 = vector.broadcast %cst_12 : f32 to vector<8x256xf32>
    %20 = arith.select %14, %18, %19 : vector<8x256xi1>, vector<8x256xf32>
    %c0_13 = arith.constant 0 : index
    %c0_14 = arith.constant 0 : index
    %21 = vector.load %arg5[%c0_13, %c0_14] : memref<1x256xf32, #tpu.memory_space<vmem>>, vector<1x256xf32>
    %22 = vector.shape_cast %21 : vector<1x256xf32> to vector<1x256xf32>
    %23 = vector.broadcast %22 : vector<1x256xf32> to vector<8x256xf32>
    %cst_15 = arith.constant 0.000000e+00 : f32
    %24 = vector.broadcast %cst_15 : f32 to vector<8x256xf32>
    %cst_16 = arith.constant 0.000000e+00 : f32
    %25 = vector.broadcast %cst_16 : f32 to vector<8x64xf32>
    %c0_i32 = arith.constant 0 : i32
    %26 = arith.index_cast %c0_i32 : i32 to index
    %c0_17 = arith.constant 0 : index
    %c0_18 = arith.constant 0 : index
    %27 = vector.load %arg9[%26, %c0_17, %c0_18] : memref<8x8x256xf32, #tpu.memory_space<vmem>>, vector<1x8x256xf32>
    %28 = vector.shape_cast %27 : vector<1x8x256xf32> to vector<8x256xf32>
    %29 = arith.addf %28, %24 : vector<8x256xf32>
    %30 = arith.negf %29 : vector<8x256xf32>
    %31 = math.exp %30 : vector<8x256xf32>
    %cst_19 = arith.constant 1.000000e+00 : f32
    %32 = vector.broadcast %cst_19 : f32 to vector<8x256xf32>
    %33 = arith.addf %32, %31 : vector<8x256xf32>
    %34 = arith.divf %32, %33 : vector<8x256xf32>
    %35 = arith.mulf %34, %17 : vector<8x256xf32>
    %36 = arith.addf %35, %20 : vector<8x256xf32>
    %37 = vector.extract_strided_slice %36 {offsets = [0, 0], sizes = [8, 64], strides = [1, 1]} : vector<8x256xf32> to vector<8x64xf32>
    %38 = vector.extract_strided_slice %36 {offsets = [0, 64], sizes = [8, 64], strides = [1, 1]} : vector<8x256xf32> to vector<8x64xf32>
    %39 = vector.extract_strided_slice %36 {offsets = [0, 128], sizes = [8, 64], strides = [1, 1]} : vector<8x256xf32> to vector<8x64xf32>
    %40 = vector.extract_strided_slice %36 {offsets = [0, 192], sizes = [8, 64], strides = [1, 1]} : vector<8x256xf32> to vector<8x64xf32>
    %41 = arith.mulf %38, %25 : vector<8x64xf32>
    %42 = arith.mulf %37, %39 : vector<8x64xf32>
    %43 = arith.addf %41, %42 : vector<8x64xf32>
    %44 = math.tanh %43 : vector<8x64xf32>
    %45 = arith.mulf %40, %44 : vector<8x64xf32>
    %46 = tpu.concatenate %45, %25 in 1 : vector<8x64xf32>, vector<8x64xf32> -> vector<8x128xf32>
    %c0_20 = arith.constant 0 : index
    %c0_21 = arith.constant 0 : index
    %47 = vector.load %arg4[%c0_20, %c0_21] : memref<128x512xf32, #tpu.memory_space<vmem>>, vector<128x512xf32>
    %cst_22 = arith.constant dense<0.000000e+00> : vector<8x512xf32>
    %48 = tpu.matmul %46, %47, %cst_22 {dimension_numbers = #tpu.dot_dimension_numbers<[1], [0], [0], [1], [0, 0, 1, 1], [], []>} : vector<8x128xf32>, vector<128x512xf32>, vector<8x512xf32> -> vector<8x512xf32>
    %49 = vector.extract_strided_slice %48 {offsets = [0, 256], sizes = [8, 256], strides = [1, 1]} : vector<8x512xf32> to vector<8x256xf32>
    %50 = vector.extract_strided_slice %48 {offsets = [0, 0], sizes = [8, 256], strides = [1, 1]} : vector<8x512xf32> to vector<8x256xf32>
    %51 = arith.addf %50, %23 : vector<8x256xf32>
    %52 = arith.negf %51 : vector<8x256xf32>
    %53 = math.exp %52 : vector<8x256xf32>
    %cst_23 = arith.constant 1.000000e+00 : f32
    %54 = vector.broadcast %cst_23 : f32 to vector<8x256xf32>
    %55 = arith.addf %54, %53 : vector<8x256xf32>
    %56 = arith.divf %54, %55 : vector<8x256xf32>
    %57 = arith.mulf %56, %17 : vector<8x256xf32>
    %58 = arith.addf %57, %20 : vector<8x256xf32>
    %59 = vector.extract_strided_slice %58 {offsets = [0, 0], sizes = [8, 64], strides = [1, 1]} : vector<8x256xf32> to vector<8x64xf32>
    %60 = vector.extract_strided_slice %58 {offsets = [0, 64], sizes = [8, 64], strides = [1, 1]} : vector<8x256xf32> to vector<8x64xf32>
    %61 = vector.extract_strided_slice %58 {offsets = [0, 128], sizes = [8, 64], strides = [1, 1]} : vector<8x256xf32> to vector<8x64xf32>
    %62 = vector.extract_strided_slice %58 {offsets = [0, 192], sizes = [8, 64], strides = [1, 1]} : vector<8x256xf32> to vector<8x64xf32>
    %63 = arith.mulf %60, %25 : vector<8x64xf32>
    %64 = arith.mulf %59, %61 : vector<8x64xf32>
    %65 = arith.addf %63, %64 : vector<8x64xf32>
    %66 = math.tanh %65 : vector<8x64xf32>
    %67 = arith.mulf %62, %66 : vector<8x64xf32>
    %c1_i32 = arith.constant 1 : i32
    %68 = arith.index_cast %c1_i32 : i32 to index
    %c0_24 = arith.constant 0 : index
    %c0_25 = arith.constant 0 : index
    %69 = vector.load %arg9[%68, %c0_24, %c0_25] : memref<8x8x256xf32, #tpu.memory_space<vmem>>, vector<1x8x256xf32>
    %70 = vector.shape_cast %69 : vector<1x8x256xf32> to vector<8x256xf32>
    %71 = arith.addf %70, %49 : vector<8x256xf32>
    %72 = arith.negf %71 : vector<8x256xf32>
    %73 = math.exp %72 : vector<8x256xf32>
    %cst_26 = arith.constant 1.000000e+00 : f32
    %74 = vector.broadcast %cst_26 : f32 to vector<8x256xf32>
    %75 = arith.addf %74, %73 : vector<8x256xf32>
    %76 = arith.divf %74, %75 : vector<8x256xf32>
    %77 = arith.mulf %76, %17 : vector<8x256xf32>
    %78 = arith.addf %77, %20 : vector<8x256xf32>
    %79 = vector.extract_strided_slice %78 {offsets = [0, 0], sizes = [8, 64], strides = [1, 1]} : vector<8x256xf32> to vector<8x64xf32>
    %80 = vector.extract_strided_slice %78 {offsets = [0, 64], sizes = [8, 64], strides = [1, 1]} : vector<8x256xf32> to vector<8x64xf32>
    %81 = vector.extract_strided_slice %78 {offsets = [0, 128], sizes = [8, 64], strides = [1, 1]} : vector<8x256xf32> to vector<8x64xf32>
    %82 = vector.extract_strided_slice %78 {offsets = [0, 192], sizes = [8, 64], strides = [1, 1]} : vector<8x256xf32> to vector<8x64xf32>
    %83 = arith.mulf %80, %43 : vector<8x64xf32>
    %84 = arith.mulf %79, %81 : vector<8x64xf32>
    %85 = arith.addf %83, %84 : vector<8x64xf32>
    %86 = math.tanh %85 : vector<8x64xf32>
    %87 = arith.mulf %82, %86 : vector<8x64xf32>
    %88 = tpu.concatenate %87, %67 in 1 : vector<8x64xf32>, vector<8x64xf32> -> vector<8x128xf32>
    %c0_27 = arith.constant 0 : index
    %c0_28 = arith.constant 0 : index
    %89 = vector.load %arg4[%c0_27, %c0_28] : memref<128x512xf32, #tpu.memory_space<vmem>>, vector<128x512xf32>
    %cst_29 = arith.constant dense<0.000000e+00> : vector<8x512xf32>
    %90 = tpu.matmul %88, %89, %cst_29 {dimension_numbers = #tpu.dot_dimension_numbers<[1], [0], [0], [1], [0, 0, 1, 1], [], []>} : vector<8x128xf32>, vector<128x512xf32>, vector<8x512xf32> -> vector<8x512xf32>
    %91 = vector.extract_strided_slice %90 {offsets = [0, 256], sizes = [8, 256], strides = [1, 1]} : vector<8x512xf32> to vector<8x256xf32>
    %92 = vector.extract_strided_slice %90 {offsets = [0, 0], sizes = [8, 256], strides = [1, 1]} : vector<8x512xf32> to vector<8x256xf32>
    %93 = arith.addf %92, %23 : vector<8x256xf32>
    %94 = arith.negf %93 : vector<8x256xf32>
    %95 = math.exp %94 : vector<8x256xf32>
    %cst_30 = arith.constant 1.000000e+00 : f32
    %96 = vector.broadcast %cst_30 : f32 to vector<8x256xf32>
    %97 = arith.addf %96, %95 : vector<8x256xf32>
    %98 = arith.divf %96, %97 : vector<8x256xf32>
    %99 = arith.mulf %98, %17 : vector<8x256xf32>
    %100 = arith.addf %99, %20 : vector<8x256xf32>
    %101 = vector.extract_strided_slice %100 {offsets = [0, 0], sizes = [8, 64], strides = [1, 1]} : vector<8x256xf32> to vector<8x64xf32>
    %102 = vector.extract_strided_slice %100 {offsets = [0, 64], sizes = [8, 64], strides = [1, 1]} : vector<8x256xf32> to vector<8x64xf32>
    %103 = vector.extract_strided_slice %100 {offsets = [0, 128], sizes = [8, 64], strides = [1, 1]} : vector<8x256xf32> to vector<8x64xf32>
    %104 = vector.extract_strided_slice %100 {offsets = [0, 192], sizes = [8, 64], strides = [1, 1]} : vector<8x256xf32> to vector<8x64xf32>
    %105 = arith.mulf %102, %65 : vector<8x64xf32>
    %106 = arith.mulf %101, %103 : vector<8x64xf32>
    %107 = arith.addf %105, %106 : vector<8x64xf32>
    %108 = math.tanh %107 : vector<8x64xf32>
    %109 = arith.mulf %104, %108 : vector<8x64xf32>
    %c2_i32 = arith.constant 2 : i32
    %110 = arith.index_cast %c2_i32 : i32 to index
    %c0_31 = arith.constant 0 : index
    %c0_32 = arith.constant 0 : index
    %111 = vector.load %arg9[%110, %c0_31, %c0_32] : memref<8x8x256xf32, #tpu.memory_space<vmem>>, vector<1x8x256xf32>
    %112 = vector.shape_cast %111 : vector<1x8x256xf32> to vector<8x256xf32>
    %113 = arith.addf %112, %91 : vector<8x256xf32>
    %114 = arith.negf %113 : vector<8x256xf32>
    %115 = math.exp %114 : vector<8x256xf32>
    %cst_33 = arith.constant 1.000000e+00 : f32
    %116 = vector.broadcast %cst_33 : f32 to vector<8x256xf32>
    %117 = arith.addf %116, %115 : vector<8x256xf32>
    %118 = arith.divf %116, %117 : vector<8x256xf32>
    %119 = arith.mulf %118, %17 : vector<8x256xf32>
    %120 = arith.addf %119, %20 : vector<8x256xf32>
    %121 = vector.extract_strided_slice %120 {offsets = [0, 0], sizes = [8, 64], strides = [1, 1]} : vector<8x256xf32> to vector<8x64xf32>
    %122 = vector.extract_strided_slice %120 {offsets = [0, 64], sizes = [8, 64], strides = [1, 1]} : vector<8x256xf32> to vector<8x64xf32>
    %123 = vector.extract_strided_slice %120 {offsets = [0, 128], sizes = [8, 64], strides = [1, 1]} : vector<8x256xf32> to vector<8x64xf32>
    %124 = vector.extract_strided_slice %120 {offsets = [0, 192], sizes = [8, 64], strides = [1, 1]} : vector<8x256xf32> to vector<8x64xf32>
    %125 = arith.mulf %122, %85 : vector<8x64xf32>
    %126 = arith.mulf %121, %123 : vector<8x64xf32>
    %127 = arith.addf %125, %126 : vector<8x64xf32>
    %128 = math.tanh %127 : vector<8x64xf32>
    %129 = arith.mulf %124, %128 : vector<8x64xf32>
    %130 = tpu.concatenate %129, %109 in 1 : vector<8x64xf32>, vector<8x64xf32> -> vector<8x128xf32>
    %c0_34 = arith.constant 0 : index
    %c0_35 = arith.constant 0 : index
    %131 = vector.load %arg4[%c0_34, %c0_35] : memref<128x512xf32, #tpu.memory_space<vmem>>, vector<128x512xf32>
    %cst_36 = arith.constant dense<0.000000e+00> : vector<8x512xf32>
    %132 = tpu.matmul %130, %131, %cst_36 {dimension_numbers = #tpu.dot_dimension_numbers<[1], [0], [0], [1], [0, 0, 1, 1], [], []>} : vector<8x128xf32>, vector<128x512xf32>, vector<8x512xf32> -> vector<8x512xf32>
    %133 = vector.extract_strided_slice %132 {offsets = [0, 256], sizes = [8, 256], strides = [1, 1]} : vector<8x512xf32> to vector<8x256xf32>
    %134 = vector.extract_strided_slice %132 {offsets = [0, 0], sizes = [8, 256], strides = [1, 1]} : vector<8x512xf32> to vector<8x256xf32>
    %135 = arith.addf %134, %23 : vector<8x256xf32>
    %136 = arith.negf %135 : vector<8x256xf32>
    %137 = math.exp %136 : vector<8x256xf32>
    %cst_37 = arith.constant 1.000000e+00 : f32
    %138 = vector.broadcast %cst_37 : f32 to vector<8x256xf32>
    %139 = arith.addf %138, %137 : vector<8x256xf32>
    %140 = arith.divf %138, %139 : vector<8x256xf32>
    %141 = arith.mulf %140, %17 : vector<8x256xf32>
    %142 = arith.addf %141, %20 : vector<8x256xf32>
    %143 = vector.extract_strided_slice %142 {offsets = [0, 0], sizes = [8, 64], strides = [1, 1]} : vector<8x256xf32> to vector<8x64xf32>
    %144 = vector.extract_strided_slice %142 {offsets = [0, 64], sizes = [8, 64], strides = [1, 1]} : vector<8x256xf32> to vector<8x64xf32>
    %145 = vector.extract_strided_slice %142 {offsets = [0, 128], sizes = [8, 64], strides = [1, 1]} : vector<8x256xf32> to vector<8x64xf32>
    %146 = vector.extract_strided_slice %142 {offsets = [0, 192], sizes = [8, 64], strides = [1, 1]} : vector<8x256xf32> to vector<8x64xf32>
    %147 = arith.mulf %144, %107 : vector<8x64xf32>
    %148 = arith.mulf %143, %145 : vector<8x64xf32>
    %149 = arith.addf %147, %148 : vector<8x64xf32>
    %150 = math.tanh %149 : vector<8x64xf32>
    %151 = arith.mulf %146, %150 : vector<8x64xf32>
    %c3_i32 = arith.constant 3 : i32
    %152 = arith.index_cast %c3_i32 : i32 to index
    %c0_38 = arith.constant 0 : index
    %c0_39 = arith.constant 0 : index
    %153 = vector.load %arg9[%152, %c0_38, %c0_39] : memref<8x8x256xf32, #tpu.memory_space<vmem>>, vector<1x8x256xf32>
    %154 = vector.shape_cast %153 : vector<1x8x256xf32> to vector<8x256xf32>
    %155 = arith.addf %154, %133 : vector<8x256xf32>
    %156 = arith.negf %155 : vector<8x256xf32>
    %157 = math.exp %156 : vector<8x256xf32>
    %cst_40 = arith.constant 1.000000e+00 : f32
    %158 = vector.broadcast %cst_40 : f32 to vector<8x256xf32>
    %159 = arith.addf %158, %157 : vector<8x256xf32>
    %160 = arith.divf %158, %159 : vector<8x256xf32>
    %161 = arith.mulf %160, %17 : vector<8x256xf32>
    %162 = arith.addf %161, %20 : vector<8x256xf32>
    %163 = vector.extract_strided_slice %162 {offsets = [0, 0], sizes = [8, 64], strides = [1, 1]} : vector<8x256xf32> to vector<8x64xf32>
    %164 = vector.extract_strided_slice %162 {offsets = [0, 64], sizes = [8, 64], strides = [1, 1]} : vector<8x256xf32> to vector<8x64xf32>
    %165 = vector.extract_strided_slice %162 {offsets = [0, 128], sizes = [8, 64], strides = [1, 1]} : vector<8x256xf32> to vector<8x64xf32>
    %166 = vector.extract_strided_slice %162 {offsets = [0, 192], sizes = [8, 64], strides = [1, 1]} : vector<8x256xf32> to vector<8x64xf32>
    %167 = arith.mulf %164, %127 : vector<8x64xf32>
    %168 = arith.mulf %163, %165 : vector<8x64xf32>
    %169 = arith.addf %167, %168 : vector<8x64xf32>
    %170 = math.tanh %169 : vector<8x64xf32>
    %171 = arith.mulf %166, %170 : vector<8x64xf32>
    %172 = tpu.concatenate %171, %151 in 1 : vector<8x64xf32>, vector<8x64xf32> -> vector<8x128xf32>
    %c0_41 = arith.constant 0 : index
    %c0_42 = arith.constant 0 : index
    %173 = vector.load %arg4[%c0_41, %c0_42] : memref<128x512xf32, #tpu.memory_space<vmem>>, vector<128x512xf32>
    %cst_43 = arith.constant dense<0.000000e+00> : vector<8x512xf32>
    %174 = tpu.matmul %172, %173, %cst_43 {dimension_numbers = #tpu.dot_dimension_numbers<[1], [0], [0], [1], [0, 0, 1, 1], [], []>} : vector<8x128xf32>, vector<128x512xf32>, vector<8x512xf32> -> vector<8x512xf32>
    %175 = vector.extract_strided_slice %174 {offsets = [0, 256], sizes = [8, 256], strides = [1, 1]} : vector<8x512xf32> to vector<8x256xf32>
    %176 = vector.extract_strided_slice %174 {offsets = [0, 0], sizes = [8, 256], strides = [1, 1]} : vector<8x512xf32> to vector<8x256xf32>
    %177 = arith.addf %176, %23 : vector<8x256xf32>
    %178 = arith.negf %177 : vector<8x256xf32>
    %179 = math.exp %178 : vector<8x256xf32>
    %cst_44 = arith.constant 1.000000e+00 : f32
    %180 = vector.broadcast %cst_44 : f32 to vector<8x256xf32>
    %181 = arith.addf %180, %179 : vector<8x256xf32>
    %182 = arith.divf %180, %181 : vector<8x256xf32>
    %183 = arith.mulf %182, %17 : vector<8x256xf32>
    %184 = arith.addf %183, %20 : vector<8x256xf32>
    %185 = vector.extract_strided_slice %184 {offsets = [0, 0], sizes = [8, 64], strides = [1, 1]} : vector<8x256xf32> to vector<8x64xf32>
    %186 = vector.extract_strided_slice %184 {offsets = [0, 64], sizes = [8, 64], strides = [1, 1]} : vector<8x256xf32> to vector<8x64xf32>
    %187 = vector.extract_strided_slice %184 {offsets = [0, 128], sizes = [8, 64], strides = [1, 1]} : vector<8x256xf32> to vector<8x64xf32>
    %188 = vector.extract_strided_slice %184 {offsets = [0, 192], sizes = [8, 64], strides = [1, 1]} : vector<8x256xf32> to vector<8x64xf32>
    %189 = arith.mulf %186, %149 : vector<8x64xf32>
    %190 = arith.mulf %185, %187 : vector<8x64xf32>
    %191 = arith.addf %189, %190 : vector<8x64xf32>
    %192 = math.tanh %191 : vector<8x64xf32>
    %193 = arith.mulf %188, %192 : vector<8x64xf32>
    %c4_i32 = arith.constant 4 : i32
    %194 = arith.index_cast %c4_i32 : i32 to index
    %c0_45 = arith.constant 0 : index
    %c0_46 = arith.constant 0 : index
    %195 = vector.load %arg9[%194, %c0_45, %c0_46] : memref<8x8x256xf32, #tpu.memory_space<vmem>>, vector<1x8x256xf32>
    %196 = vector.shape_cast %195 : vector<1x8x256xf32> to vector<8x256xf32>
    %197 = arith.addf %196, %175 : vector<8x256xf32>
    %198 = arith.negf %197 : vector<8x256xf32>
    %199 = math.exp %198 : vector<8x256xf32>
    %cst_47 = arith.constant 1.000000e+00 : f32
    %200 = vector.broadcast %cst_47 : f32 to vector<8x256xf32>
    %201 = arith.addf %200, %199 : vector<8x256xf32>
    %202 = arith.divf %200, %201 : vector<8x256xf32>
    %203 = arith.mulf %202, %17 : vector<8x256xf32>
    %204 = arith.addf %203, %20 : vector<8x256xf32>
    %205 = vector.extract_strided_slice %204 {offsets = [0, 0], sizes = [8, 64], strides = [1, 1]} : vector<8x256xf32> to vector<8x64xf32>
    %206 = vector.extract_strided_slice %204 {offsets = [0, 64], sizes = [8, 64], strides = [1, 1]} : vector<8x256xf32> to vector<8x64xf32>
    %207 = vector.extract_strided_slice %204 {offsets = [0, 128], sizes = [8, 64], strides = [1, 1]} : vector<8x256xf32> to vector<8x64xf32>
    %208 = vector.extract_strided_slice %204 {offsets = [0, 192], sizes = [8, 64], strides = [1, 1]} : vector<8x256xf32> to vector<8x64xf32>
    %209 = arith.mulf %206, %169 : vector<8x64xf32>
    %210 = arith.mulf %205, %207 : vector<8x64xf32>
    %211 = arith.addf %209, %210 : vector<8x64xf32>
    %212 = math.tanh %211 : vector<8x64xf32>
    %213 = arith.mulf %208, %212 : vector<8x64xf32>
    %214 = tpu.concatenate %213, %193 in 1 : vector<8x64xf32>, vector<8x64xf32> -> vector<8x128xf32>
    %c0_48 = arith.constant 0 : index
    %c0_49 = arith.constant 0 : index
    %215 = vector.load %arg4[%c0_48, %c0_49] : memref<128x512xf32, #tpu.memory_space<vmem>>, vector<128x512xf32>
    %cst_50 = arith.constant dense<0.000000e+00> : vector<8x512xf32>
    %216 = tpu.matmul %214, %215, %cst_50 {dimension_numbers = #tpu.dot_dimension_numbers<[1], [0], [0], [1], [0, 0, 1, 1], [], []>} : vector<8x128xf32>, vector<128x512xf32>, vector<8x512xf32> -> vector<8x512xf32>
    %217 = vector.extract_strided_slice %216 {offsets = [0, 256], sizes = [8, 256], strides = [1, 1]} : vector<8x512xf32> to vector<8x256xf32>
    %218 = vector.extract_strided_slice %216 {offsets = [0, 0], sizes = [8, 256], strides = [1, 1]} : vector<8x512xf32> to vector<8x256xf32>
    %219 = arith.addf %218, %23 : vector<8x256xf32>
    %220 = arith.negf %219 : vector<8x256xf32>
    %221 = math.exp %220 : vector<8x256xf32>
    %cst_51 = arith.constant 1.000000e+00 : f32
    %222 = vector.broadcast %cst_51 : f32 to vector<8x256xf32>
    %223 = arith.addf %222, %221 : vector<8x256xf32>
    %224 = arith.divf %222, %223 : vector<8x256xf32>
    %225 = arith.mulf %224, %17 : vector<8x256xf32>
    %226 = arith.addf %225, %20 : vector<8x256xf32>
    %227 = vector.extract_strided_slice %226 {offsets = [0, 0], sizes = [8, 64], strides = [1, 1]} : vector<8x256xf32> to vector<8x64xf32>
    %228 = vector.extract_strided_slice %226 {offsets = [0, 64], sizes = [8, 64], strides = [1, 1]} : vector<8x256xf32> to vector<8x64xf32>
    %229 = vector.extract_strided_slice %226 {offsets = [0, 128], sizes = [8, 64], strides = [1, 1]} : vector<8x256xf32> to vector<8x64xf32>
    %230 = vector.extract_strided_slice %226 {offsets = [0, 192], sizes = [8, 64], strides = [1, 1]} : vector<8x256xf32> to vector<8x64xf32>
    %231 = arith.mulf %228, %191 : vector<8x64xf32>
    %232 = arith.mulf %227, %229 : vector<8x64xf32>
    %233 = arith.addf %231, %232 : vector<8x64xf32>
    %234 = math.tanh %233 : vector<8x64xf32>
    %235 = arith.mulf %230, %234 : vector<8x64xf32>
    %c5_i32 = arith.constant 5 : i32
    %236 = arith.index_cast %c5_i32 : i32 to index
    %c0_52 = arith.constant 0 : index
    %c0_53 = arith.constant 0 : index
    %237 = vector.load %arg9[%236, %c0_52, %c0_53] : memref<8x8x256xf32, #tpu.memory_space<vmem>>, vector<1x8x256xf32>
    %238 = vector.shape_cast %237 : vector<1x8x256xf32> to vector<8x256xf32>
    %239 = arith.addf %238, %217 : vector<8x256xf32>
    %240 = arith.negf %239 : vector<8x256xf32>
    %241 = math.exp %240 : vector<8x256xf32>
    %cst_54 = arith.constant 1.000000e+00 : f32
    %242 = vector.broadcast %cst_54 : f32 to vector<8x256xf32>
    %243 = arith.addf %242, %241 : vector<8x256xf32>
    %244 = arith.divf %242, %243 : vector<8x256xf32>
    %245 = arith.mulf %244, %17 : vector<8x256xf32>
    %246 = arith.addf %245, %20 : vector<8x256xf32>
    %247 = vector.extract_strided_slice %246 {offsets = [0, 0], sizes = [8, 64], strides = [1, 1]} : vector<8x256xf32> to vector<8x64xf32>
    %248 = vector.extract_strided_slice %246 {offsets = [0, 64], sizes = [8, 64], strides = [1, 1]} : vector<8x256xf32> to vector<8x64xf32>
    %249 = vector.extract_strided_slice %246 {offsets = [0, 128], sizes = [8, 64], strides = [1, 1]} : vector<8x256xf32> to vector<8x64xf32>
    %250 = vector.extract_strided_slice %246 {offsets = [0, 192], sizes = [8, 64], strides = [1, 1]} : vector<8x256xf32> to vector<8x64xf32>
    %251 = arith.mulf %248, %211 : vector<8x64xf32>
    %252 = arith.mulf %247, %249 : vector<8x64xf32>
    %253 = arith.addf %251, %252 : vector<8x64xf32>
    %254 = math.tanh %253 : vector<8x64xf32>
    %255 = arith.mulf %250, %254 : vector<8x64xf32>
    %256 = tpu.concatenate %255, %235 in 1 : vector<8x64xf32>, vector<8x64xf32> -> vector<8x128xf32>
    %c0_55 = arith.constant 0 : index
    %c0_56 = arith.constant 0 : index
    %257 = vector.load %arg4[%c0_55, %c0_56] : memref<128x512xf32, #tpu.memory_space<vmem>>, vector<128x512xf32>
    %cst_57 = arith.constant dense<0.000000e+00> : vector<8x512xf32>
    %258 = tpu.matmul %256, %257, %cst_57 {dimension_numbers = #tpu.dot_dimension_numbers<[1], [0], [0], [1], [0, 0, 1, 1], [], []>} : vector<8x128xf32>, vector<128x512xf32>, vector<8x512xf32> -> vector<8x512xf32>
    %259 = vector.extract_strided_slice %258 {offsets = [0, 256], sizes = [8, 256], strides = [1, 1]} : vector<8x512xf32> to vector<8x256xf32>
    %260 = vector.extract_strided_slice %258 {offsets = [0, 0], sizes = [8, 256], strides = [1, 1]} : vector<8x512xf32> to vector<8x256xf32>
    %261 = arith.addf %260, %23 : vector<8x256xf32>
    %262 = arith.negf %261 : vector<8x256xf32>
    %263 = math.exp %262 : vector<8x256xf32>
    %cst_58 = arith.constant 1.000000e+00 : f32
    %264 = vector.broadcast %cst_58 : f32 to vector<8x256xf32>
    %265 = arith.addf %264, %263 : vector<8x256xf32>
    %266 = arith.divf %264, %265 : vector<8x256xf32>
    %267 = arith.mulf %266, %17 : vector<8x256xf32>
    %268 = arith.addf %267, %20 : vector<8x256xf32>
    %269 = vector.extract_strided_slice %268 {offsets = [0, 0], sizes = [8, 64], strides = [1, 1]} : vector<8x256xf32> to vector<8x64xf32>
    %270 = vector.extract_strided_slice %268 {offsets = [0, 64], sizes = [8, 64], strides = [1, 1]} : vector<8x256xf32> to vector<8x64xf32>
    %271 = vector.extract_strided_slice %268 {offsets = [0, 128], sizes = [8, 64], strides = [1, 1]} : vector<8x256xf32> to vector<8x64xf32>
    %272 = vector.extract_strided_slice %268 {offsets = [0, 192], sizes = [8, 64], strides = [1, 1]} : vector<8x256xf32> to vector<8x64xf32>
    %273 = arith.mulf %270, %233 : vector<8x64xf32>
    %274 = arith.mulf %269, %271 : vector<8x64xf32>
    %275 = arith.addf %273, %274 : vector<8x64xf32>
    %276 = math.tanh %275 : vector<8x64xf32>
    %277 = arith.mulf %272, %276 : vector<8x64xf32>
    %c6_i32 = arith.constant 6 : i32
    %278 = arith.index_cast %c6_i32 : i32 to index
    %c0_59 = arith.constant 0 : index
    %c0_60 = arith.constant 0 : index
    %279 = vector.load %arg9[%278, %c0_59, %c0_60] : memref<8x8x256xf32, #tpu.memory_space<vmem>>, vector<1x8x256xf32>
    %280 = vector.shape_cast %279 : vector<1x8x256xf32> to vector<8x256xf32>
    %281 = arith.addf %280, %259 : vector<8x256xf32>
    %282 = arith.negf %281 : vector<8x256xf32>
    %283 = math.exp %282 : vector<8x256xf32>
    %cst_61 = arith.constant 1.000000e+00 : f32
    %284 = vector.broadcast %cst_61 : f32 to vector<8x256xf32>
    %285 = arith.addf %284, %283 : vector<8x256xf32>
    %286 = arith.divf %284, %285 : vector<8x256xf32>
    %287 = arith.mulf %286, %17 : vector<8x256xf32>
    %288 = arith.addf %287, %20 : vector<8x256xf32>
    %289 = vector.extract_strided_slice %288 {offsets = [0, 0], sizes = [8, 64], strides = [1, 1]} : vector<8x256xf32> to vector<8x64xf32>
    %290 = vector.extract_strided_slice %288 {offsets = [0, 64], sizes = [8, 64], strides = [1, 1]} : vector<8x256xf32> to vector<8x64xf32>
    %291 = vector.extract_strided_slice %288 {offsets = [0, 128], sizes = [8, 64], strides = [1, 1]} : vector<8x256xf32> to vector<8x64xf32>
    %292 = vector.extract_strided_slice %288 {offsets = [0, 192], sizes = [8, 64], strides = [1, 1]} : vector<8x256xf32> to vector<8x64xf32>
    %293 = arith.mulf %290, %253 : vector<8x64xf32>
    %294 = arith.mulf %289, %291 : vector<8x64xf32>
    %295 = arith.addf %293, %294 : vector<8x64xf32>
    %296 = math.tanh %295 : vector<8x64xf32>
    %297 = arith.mulf %292, %296 : vector<8x64xf32>
    %298 = tpu.concatenate %297, %277 in 1 : vector<8x64xf32>, vector<8x64xf32> -> vector<8x128xf32>
    %c0_62 = arith.constant 0 : index
    %c0_63 = arith.constant 0 : index
    %299 = vector.load %arg4[%c0_62, %c0_63] : memref<128x512xf32, #tpu.memory_space<vmem>>, vector<128x512xf32>
    %cst_64 = arith.constant dense<0.000000e+00> : vector<8x512xf32>
    %300 = tpu.matmul %298, %299, %cst_64 {dimension_numbers = #tpu.dot_dimension_numbers<[1], [0], [0], [1], [0, 0, 1, 1], [], []>} : vector<8x128xf32>, vector<128x512xf32>, vector<8x512xf32> -> vector<8x512xf32>
    %301 = vector.extract_strided_slice %300 {offsets = [0, 256], sizes = [8, 256], strides = [1, 1]} : vector<8x512xf32> to vector<8x256xf32>
    %302 = vector.extract_strided_slice %300 {offsets = [0, 0], sizes = [8, 256], strides = [1, 1]} : vector<8x512xf32> to vector<8x256xf32>
    %303 = arith.addf %302, %23 : vector<8x256xf32>
    %304 = arith.negf %303 : vector<8x256xf32>
    %305 = math.exp %304 : vector<8x256xf32>
    %cst_65 = arith.constant 1.000000e+00 : f32
    %306 = vector.broadcast %cst_65 : f32 to vector<8x256xf32>
    %307 = arith.addf %306, %305 : vector<8x256xf32>
    %308 = arith.divf %306, %307 : vector<8x256xf32>
    %309 = arith.mulf %308, %17 : vector<8x256xf32>
    %310 = arith.addf %309, %20 : vector<8x256xf32>
    %311 = vector.extract_strided_slice %310 {offsets = [0, 0], sizes = [8, 64], strides = [1, 1]} : vector<8x256xf32> to vector<8x64xf32>
    %312 = vector.extract_strided_slice %310 {offsets = [0, 64], sizes = [8, 64], strides = [1, 1]} : vector<8x256xf32> to vector<8x64xf32>
    %313 = vector.extract_strided_slice %310 {offsets = [0, 128], sizes = [8, 64], strides = [1, 1]} : vector<8x256xf32> to vector<8x64xf32>
    %314 = vector.extract_strided_slice %310 {offsets = [0, 192], sizes = [8, 64], strides = [1, 1]} : vector<8x256xf32> to vector<8x64xf32>
    %315 = arith.mulf %312, %275 : vector<8x64xf32>
    %316 = arith.mulf %311, %313 : vector<8x64xf32>
    %317 = arith.addf %315, %316 : vector<8x64xf32>
    %318 = math.tanh %317 : vector<8x64xf32>
    %319 = arith.mulf %314, %318 : vector<8x64xf32>
    %c7_i32 = arith.constant 7 : i32
    %320 = arith.index_cast %c7_i32 : i32 to index
    %c0_66 = arith.constant 0 : index
    %c0_67 = arith.constant 0 : index
    %321 = vector.load %arg9[%320, %c0_66, %c0_67] : memref<8x8x256xf32, #tpu.memory_space<vmem>>, vector<1x8x256xf32>
    %322 = vector.shape_cast %321 : vector<1x8x256xf32> to vector<8x256xf32>
    %323 = arith.addf %322, %301 : vector<8x256xf32>
    %324 = arith.negf %323 : vector<8x256xf32>
    %325 = math.exp %324 : vector<8x256xf32>
    %cst_68 = arith.constant 1.000000e+00 : f32
    %326 = vector.broadcast %cst_68 : f32 to vector<8x256xf32>
    %327 = arith.addf %326, %325 : vector<8x256xf32>
    %328 = arith.divf %326, %327 : vector<8x256xf32>
    %329 = arith.mulf %328, %17 : vector<8x256xf32>
    %330 = arith.addf %329, %20 : vector<8x256xf32>
    %331 = vector.extract_strided_slice %330 {offsets = [0, 0], sizes = [8, 64], strides = [1, 1]} : vector<8x256xf32> to vector<8x64xf32>
    %332 = vector.extract_strided_slice %330 {offsets = [0, 64], sizes = [8, 64], strides = [1, 1]} : vector<8x256xf32> to vector<8x64xf32>
    %333 = vector.extract_strided_slice %330 {offsets = [0, 128], sizes = [8, 64], strides = [1, 1]} : vector<8x256xf32> to vector<8x64xf32>
    %334 = vector.extract_strided_slice %330 {offsets = [0, 192], sizes = [8, 64], strides = [1, 1]} : vector<8x256xf32> to vector<8x64xf32>
    %335 = arith.mulf %332, %295 : vector<8x64xf32>
    %336 = arith.mulf %331, %333 : vector<8x64xf32>
    %337 = arith.addf %335, %336 : vector<8x64xf32>
    %338 = math.tanh %337 : vector<8x64xf32>
    %339 = arith.mulf %334, %338 : vector<8x64xf32>
    %340 = tpu.concatenate %339, %319 in 1 : vector<8x64xf32>, vector<8x64xf32> -> vector<8x128xf32>
    %c0_69 = arith.constant 0 : index
    %c0_70 = arith.constant 0 : index
    %341 = vector.load %arg4[%c0_69, %c0_70] : memref<128x512xf32, #tpu.memory_space<vmem>>, vector<128x512xf32>
    %cst_71 = arith.constant dense<0.000000e+00> : vector<8x512xf32>
    %342 = tpu.matmul %340, %341, %cst_71 {dimension_numbers = #tpu.dot_dimension_numbers<[1], [0], [0], [1], [0, 0, 1, 1], [], []>} : vector<8x128xf32>, vector<128x512xf32>, vector<8x512xf32> -> vector<8x512xf32>
    %343 = vector.extract_strided_slice %342 {offsets = [0, 256], sizes = [8, 256], strides = [1, 1]} : vector<8x512xf32> to vector<8x256xf32>
    %344 = vector.extract_strided_slice %342 {offsets = [0, 0], sizes = [8, 256], strides = [1, 1]} : vector<8x512xf32> to vector<8x256xf32>
    %345 = arith.addf %344, %23 : vector<8x256xf32>
    %346 = arith.negf %345 : vector<8x256xf32>
    %347 = math.exp %346 : vector<8x256xf32>
    %cst_72 = arith.constant 1.000000e+00 : f32
    %348 = vector.broadcast %cst_72 : f32 to vector<8x256xf32>
    %349 = arith.addf %348, %347 : vector<8x256xf32>
    %350 = arith.divf %348, %349 : vector<8x256xf32>
    %351 = arith.mulf %350, %17 : vector<8x256xf32>
    %352 = arith.addf %351, %20 : vector<8x256xf32>
    %353 = vector.extract_strided_slice %352 {offsets = [0, 0], sizes = [8, 64], strides = [1, 1]} : vector<8x256xf32> to vector<8x64xf32>
    %354 = vector.extract_strided_slice %352 {offsets = [0, 64], sizes = [8, 64], strides = [1, 1]} : vector<8x256xf32> to vector<8x64xf32>
    %355 = vector.extract_strided_slice %352 {offsets = [0, 128], sizes = [8, 64], strides = [1, 1]} : vector<8x256xf32> to vector<8x64xf32>
    %356 = vector.extract_strided_slice %352 {offsets = [0, 192], sizes = [8, 64], strides = [1, 1]} : vector<8x256xf32> to vector<8x64xf32>
    %357 = arith.mulf %354, %317 : vector<8x64xf32>
    %358 = arith.mulf %353, %355 : vector<8x64xf32>
    %359 = arith.addf %357, %358 : vector<8x64xf32>
    %360 = math.tanh %359 : vector<8x64xf32>
    %361 = arith.mulf %356, %360 : vector<8x64xf32>
    %c8_i32 = arith.constant 8 : i32
    %c0_73 = arith.constant 0 : index
    %c0_74 = arith.constant 0 : index
    %362 = vector.load %arg6[%c0_73, %c0_74] : memref<64x128xf32, #tpu.memory_space<vmem>>, vector<64x128xf32>
    %cst_75 = arith.constant dense<0.000000e+00> : vector<8x128xf32>
    %363 = tpu.matmul %361, %362, %cst_75 {dimension_numbers = #tpu.dot_dimension_numbers<[1], [0], [0], [1], [0, 0, 1, 1], [], []>} : vector<8x64xf32>, vector<64x128xf32>, vector<8x128xf32> -> vector<8x128xf32>
    %c0_76 = arith.constant 0 : index
    %c0_77 = arith.constant 0 : index
    %364 = vector.load %arg7[%c0_76, %c0_77] : memref<1x128xf32, #tpu.memory_space<vmem>>, vector<1x128xf32>
    %365 = vector.broadcast %364 : vector<1x128xf32> to vector<8x128xf32>
    %366 = arith.addf %363, %365 : vector<8x128xf32>
    %c0_78 = arith.constant 0 : index
    %c0_79 = arith.constant 0 : index
    %367 = vector.load %arg8[%c0_78, %c0_79] : memref<8x128xf32, #tpu.memory_space<vmem>>, vector<8x128xf32>
    tpu.vector_store %arg8[%c0_78, %c0_79], %366 {strides = array<i32>} : memref<8x128xf32, #tpu.memory_space<vmem>>, vector<8x128xf32>,
    return
  }
  func.func @transform_0(%arg0: i32) -> (i32, i32, i32) {
    %c0_i32 = arith.constant 0 : i32
    %c0_i32_0 = arith.constant 0 : i32
    %c0_i32_1 = arith.constant 0 : i32
    return %c0_i32, %arg0, %c0_i32_0 : i32, i32, i32
  }
  func.func @transform_1(%arg0: i32) -> (i32, i32) {
    %c0_i32 = arith.constant 0 : i32
    %c0_i32_0 = arith.constant 0 : i32
    %c0_i32_1 = arith.constant 0 : i32
    return %c0_i32, %c0_i32_0 : i32, i32
  }
  func.func @transform_2(%arg0: i32) -> (i32, i32) {
    %c0_i32 = arith.constant 0 : i32
    %c0_i32_0 = arith.constant 0 : i32
    %c0_i32_1 = arith.constant 0 : i32
    return %c0_i32, %c0_i32_0 : i32, i32
  }
  func.func @transform_3(%arg0: i32) -> (i32, i32) {
    %c0_i32 = arith.constant 0 : i32
    %c0_i32_0 = arith.constant 0 : i32
    %c0_i32_1 = arith.constant 0 : i32
    return %c0_i32, %c0_i32_0 : i32, i32
  }
  func.func @transform_4(%arg0: i32) -> (i32, i32) {
    %c0_i32 = arith.constant 0 : i32
    %c0_i32_0 = arith.constant 0 : i32
    %c0_i32_1 = arith.constant 0 : i32
    return %c0_i32, %c0_i32_0 : i32, i32
  }
  func.func @transform_5(%arg0: i32) -> (i32, i32) {
    %c0_i32 = arith.constant 0 : i32
    %c0_i32_0 = arith.constant 0 : i32
    %c0_i32_1 = arith.constant 0 : i32
    return %c0_i32, %c0_i32_0 : i32, i32
  }
  func.func @transform_6(%arg0: i32) -> (i32, i32) {
    %c0_i32 = arith.constant 0 : i32
    %c0_i32_0 = arith.constant 0 : i32
    %c0_i32_1 = arith.constant 0 : i32
    return %c0_i32, %c0_i32_0 : i32, i32
  }
  func.func @transform_7(%arg0: i32) -> (i32, i32) {
    %c0_i32 = arith.constant 0 : i32
    %c0_i32_0 = arith.constant 0 : i32
    return %arg0, %c0_i32 : i32, i32
  }
}

</mosaic_0001>

<llo_original>
// kernel: tpu_custom_call.1
$region0: #{tpu_custom_call.1}
  #allocation0 [shape = 'u32[]', space=smem, size = 0x4, offset = 0x4, fixed_abs, tag = 'smem constant byte address 0x4 - core index']
  #allocation1 [shape = 'u32[144,128]{1,0:T(1,128)}', space=vmem, size = 0x12000, scoped, tag = 'internal scratch']
  #allocation2 [shape = 'f32[8,8,256]{2,1,0:T(8,128)}', space=vmem, size = 0x10000, scoped, tag = 'scratch operand']
  %s0 = inlined_call_operand.hbm [shape: f32[8,8,128], index: 0, kind: input, shape index: {}]
  %s1 = inlined_call_operand.hbm [shape: f32[128,256], index: 1, kind: input, shape index: {}]
  %s2 = inlined_call_operand.vmem [shape: f32[1,256], index: 2, kind: input, shape index: {}]
  %s3 = inlined_call_operand.hbm [shape: f32[128,512], index: 3, kind: input, shape index: {}]
  %s4 = inlined_call_operand.vmem [shape: f32[1,256], index: 4, kind: input, shape index: {}]
  %s5 = inlined_call_operand.hbm [shape: f32[64,128], index: 5, kind: input, shape index: {}]
  %s6 = inlined_call_operand.vmem [shape: f32[1,128], index: 6, kind: input, shape index: {}]
  %s7 = inlined_call_operand.hbm [shape: f32[8,128], index: 7, kind: output, shape index: {}]
  %s8 = sld [smem:[#allocation0]]
  $region54: #{tpu_custom_call.1} parent=0
    _
  %s10 = ssub.s32 1, %s8
  %s11 = scalar_select 0, %s10, %s8
  $region1: #{tpu_custom_call.1} parent=0
    #allocation3 [shape = 'u8[32768]{0}', space=vmem, size = 0x8000, scoped, tag = 'input window, operand 0, single buffered']
    #allocation4 [shape = 's32[1]{0}', space=sflag, size = 0x4, scoped, tag = 'scoped memory for tpu_custom_call.1']
    #allocation5 [shape = 's32[1]{0}', space=sflag, size = 0x4, scoped, tag = 'scoped memory for tpu_custom_call.1']
    #allocation6 [shape = 'u8[131072]{0}', space=vmem, size = 0x20000, scoped, tag = 'input window, operand 1, single buffered']
    #allocation7 [shape = 's32[1]{0}', space=sflag, size = 0x4, scoped, tag = 'scoped memory for tpu_custom_call.1']
    #allocation8 [shape = 'u8[262144]{0}', space=vmem, size = 0x40000, scoped, tag = 'input window, operand 3, single buffered']
    #allocation9 [shape = 'u8[32768]{0}', space=vmem, size = 0x8000, scoped, tag = 'input window, operand 5, single buffered']
    #allocation10 [shape = 's32[1]{0}', space=sflag, size = 0x4, scoped, tag = 'scoped memory for tpu_custom_call.1']
    #allocation11 [shape = 'u8[4096]{0}', space=vmem, size = 0x1000, scoped, tag = 'output window, operand 0, single buffered']
    %12 = vsyncpa [#allocation4], 0
    %13 = vsyncpa [#allocation7], 0
    %14 = vsyncpa [#allocation10], 0
    %15 = vsyncpa [#allocation5], 0
    // Predicated region
    $region2: #{tpu_custom_call.1} parent=1 // pred_check
      _
    $region3: #{tpu_custom_call.1} parent=1 // pred_check_branch
      %17 = sbr.rel (0) target = $region5
    $region4: #{tpu_custom_call.1} parent=1 // pred_region
      %s19 = ssub.s32 1024, 1024
      %20 = vsyncadd [#allocation4], %s19
      %s21 = sshll.u32 [#allocation3], 4
      %s22 = int_to_ptr.vmem [resolvable:$true] %s21
      %27 = dma.hbm_to_vmem [thread:$0]  %s0, 1024, %s22, [#allocation4], 128, 128, 8
    $region5: #{tpu_custom_call.1} parent=1 // pred_fallthru
      _
    // Predicated region
    $region6: #{tpu_custom_call.1} parent=1 // pred_check
      _
    $region7: #{tpu_custom_call.1} parent=1 // pred_check_branch
      %29 = sbr.rel (0) target = $region9
    $region8: #{tpu_custom_call.1} parent=1 // pred_region
      %s31 = ssub.s32 4096, 4096
      %32 = vsyncadd [#allocation7], %s31
      %s33 = sshll.u32 [#allocation6], 4
      %s34 = int_to_ptr.vmem [resolvable:$true] %s33
      %39 = dma.hbm_to_vmem [thread:$0]  %s1, 4096, %s34, [#allocation7], 256, 256, 16
    $region9: #{tpu_custom_call.1} parent=1 // pred_fallthru
      _
    // Predicated region
    $region10: #{tpu_custom_call.1} parent=1 // pred_check
      _
    $region11: #{tpu_custom_call.1} parent=1 // pred_check_branch
      %41 = sbr.rel (0) target = $region13
    $region12: #{tpu_custom_call.1} parent=1 // pred_region
      _
    $region13: #{tpu_custom_call.1} parent=1 // pred_fallthru
      _
    // Predicated region
    $region14: #{tpu_custom_call.1} parent=1 // pred_check
      _
    $region15: #{tpu_custom_call.1} parent=1 // pred_check_branch
      %43 = sbr.rel (0) target = $region17
    $region16: #{tpu_custom_call.1} parent=1 // pred_region
      %s45 = ssub.s32 8192, 8192
      %46 = vsyncadd [#allocation7], %s45
      %s47 = sshll.u32 [#allocation8], 4
      %s48 = int_to_ptr.vmem [resolvable:$true] %s47
      %53 = dma.hbm_to_vmem [thread:$0]  %s3, 8192, %s48, [#allocation7], 512, 512, 32
    $region17: #{tpu_custom_call.1} parent=1 // pred_fallthru
      _
    // Predicated region
    $region18: #{tpu_custom_call.1} parent=1 // pred_check
      _
    $region19: #{tpu_custom_call.1} parent=1 // pred_check_branch
      %55 = sbr.rel (0) target = $region21
    $region20: #{tpu_custom_call.1} parent=1 // pred_region
      _
    $region21: #{tpu_custom_call.1} parent=1 // pred_fallthru
      _
    // Predicated region
    $region22: #{tpu_custom_call.1} parent=1 // pred_check
      _
    $region23: #{tpu_custom_call.1} parent=1 // pred_check_branch
      %57 = sbr.rel (0) target = $region25
    $region24: #{tpu_custom_call.1} parent=1 // pred_region
      %s59 = ssub.s32 1024, 1024
      %60 = vsyncadd [#allocation10], %s59
      %s61 = sshll.u32 [#allocation9], 4
      %s62 = int_to_ptr.vmem [resolvable:$true] %s61
      %67 = dma.hbm_to_vmem [thread:$0]  %s5, 1024, %s62, [#allocation10], 128, 128, 8
    $region25: #{tpu_custom_call.1} parent=1 // pred_fallthru
      _
    // Predicated region
    $region26: #{tpu_custom_call.1} parent=1 // pred_check
      _
    $region27: #{tpu_custom_call.1} parent=1 // pred_check_branch
      %69 = sbr.rel (0) target = $region29
    $region28: #{tpu_custom_call.1} parent=1 // pred_region
      _
    $region29: #{tpu_custom_call.1} parent=1 // pred_fallthru
      _
    // Predicated region
    $region30: #{tpu_custom_call.1} parent=1 // pred_check
      _
    $region31: #{tpu_custom_call.1} parent=1 // pred_check_branch
      %71 = sbr.rel (0) target = $region33
    $region32: #{tpu_custom_call.1} parent=1 // pred_region
      %72 = dma.done [#allocation4], 1024
    $region33: #{tpu_custom_call.1} parent=1 // pred_fallthru
      _
    // Predicated region
    $region34: #{tpu_custom_call.1} parent=1 // pred_check
      _
    $region35: #{tpu_custom_call.1} parent=1 // pred_check_branch
      %74 = sbr.rel (0) target = $region37
    $region36: #{tpu_custom_call.1} parent=1 // pred_region
      %75 = dma.done [#allocation7], 4096
    $region37: #{tpu_custom_call.1} parent=1 // pred_fallthru
      _
    // Predicated region
    $region38: #{tpu_custom_call.1} parent=1 // pred_check
      _
    $region39: #{tpu_custom_call.1} parent=1 // pred_check_branch
      %77 = sbr.rel (0) target = $region41
    $region40: #{tpu_custom_call.1} parent=1 // pred_region
      %78 = dma.done [#allocation7], 8192
    $region41: #{tpu_custom_call.1} parent=1 // pred_fallthru
      _
    // Predicated region
    $region42: #{tpu_custom_call.1} parent=1 // pred_check
      _
    $region43: #{tpu_custom_call.1} parent=1 // pred_check_branch
      %80 = sbr.rel (0) target = $region45
    $region44: #{tpu_custom_call.1} parent=1 // pred_region
      %81 = dma.done [#allocation10], 1024
    $region45: #{tpu_custom_call.1} parent=1 // pred_fallthru
      _
    %v82 = vld [vmem:[#allocation3] sm:$0xff]
    %v83 = vld [vmem:[#allocation3 + $0x8] sm:$0xff]
    %v84 = vld [vmem:[#allocation3 + $0x10] sm:$0xff]
    %v85 = vld [vmem:[#allocation3 + $0x18] sm:$0xff]
    %v86 = vld [vmem:[#allocation3 + $0x20] sm:$0xff]
    %v87 = vld [vmem:[#allocation3 + $0x28] sm:$0xff]
    %v88 = vld [vmem:[#allocation3 + $0x30] sm:$0xff]
    %v89 = vld [vmem:[#allocation3 + $0x38] sm:$0xff]
    %v90 = vld [vmem:[#allocation6] sm:$0xff]
    %v91 = vld [vmem:[#allocation6 + $0x8] sm:$0xff]
    %v92 = vld [vmem:[#allocation6 + $0x10] sm:$0xff]
    %v93 = vld [vmem:[#allocation6 + $0x18] sm:$0xff]
    %v94 = vld [vmem:[#allocation6 + $0x20] sm:$0xff]
    %v95 = vld [vmem:[#allocation6 + $0x28] sm:$0xff]
    %v96 = vld [vmem:[#allocation6 + $0x30] sm:$0xff]
    %v97 = vld [vmem:[#allocation6 + $0x38] sm:$0xff]
    %v98 = vld [vmem:[#allocation6 + $0x40] sm:$0xff]
    %v99 = vld [vmem:[#allocation6 + $0x48] sm:$0xff]
    %v100 = vld [vmem:[#allocation6 + $0x50] sm:$0xff]
    %v101 = vld [vmem:[#allocation6 + $0x58] sm:$0xff]
    %v102 = vld [vmem:[#allocation6 + $0x60] sm:$0xff]
    %v103 = vld [vmem:[#allocation6 + $0x68] sm:$0xff]
    %v104 = vld [vmem:[#allocation6 + $0x70] sm:$0xff]
    %v105 = vld [vmem:[#allocation6 + $0x78] sm:$0xff]
    %v106 = vld [vmem:[#allocation6 + $0x80] sm:$0xff]
    %v107 = vld [vmem:[#allocation6 + $0x88] sm:$0xff]
    %v108 = vld [vmem:[#allocation6 + $0x90] sm:$0xff]
    %v109 = vld [vmem:[#allocation6 + $0x98] sm:$0xff]
    %v110 = vld [vmem:[#allocation6 + $0xa0] sm:$0xff]
    %v111 = vld [vmem:[#allocation6 + $0xa8] sm:$0xff]
    %v112 = vld [vmem:[#allocation6 + $0xb0] sm:$0xff]
    %v113 = vld [vmem:[#allocation6 + $0xb8] sm:$0xff]
    %v114 = vld [vmem:[#allocation6 + $0xc0] sm:$0xff]
    %v115 = vld [vmem:[#allocation6 + $0xc8] sm:$0xff]
    %v116 = vld [vmem:[#allocation6 + $0xd0] sm:$0xff]
    %v117 = vld [vmem:[#allocation6 + $0xd8] sm:$0xff]
    %v118 = vld [vmem:[#allocation6 + $0xe0] sm:$0xff]
    %v119 = vld [vmem:[#allocation6 + $0xe8] sm:$0xff]
    %v120 = vld [vmem:[#allocation6 + $0xf0] sm:$0xff]
    %v121 = vld [vmem:[#allocation6 + $0xf8] sm:$0xff]
    %v122 = vld [vmem:[%s2] sm:$0x3]
    %v124 = vlaneseq
    %v125 = vshrl.u32 %v124, 7
    %v126 = vsub.s32 0, %v125
    %v127 = vrot.slane %v122, %v126
    %v128 = vlaneseq
    %v129 = vshrl.u32 %v128, 7
    %v130 = vsub.s32 1, %v129
    %v131 = vrot.slane %v122, %v130
    %134 = vmatprep.subr.mxu0 %v121
    %135 = vmatpush1.msra.mxu0 %v120
    %136 = vmatprep.subr.mxu0 %v119
    %137 = vmatpush1.msra.mxu0 %v118
    %138 = vmatprep.subr.mxu0 %v117
    %139 = vmatpush1.msra.mxu0 %v116
    %140 = vmatprep.subr.mxu0 %v115
    %141 = vmatpush1.msra.mxu0 %v114
    %142 = vmatprep.subr.mxu0 %v113
    %143 = vmatpush1.msra.mxu0 %v112
    %144 = vmatprep.subr.mxu0 %v111
    %145 = vmatpush1.msra.mxu0 %v110
    %146 = vmatprep.subr.mxu0 %v109
    %147 = vmatpush1.msra.mxu0 %v108
    %148 = vmatprep.subr.mxu0 %v107
    %149 = vmatpush1.msra.mxu0 %v106
    %150 = vmatprep.subr.mxu0 %v105
    %151 = vmatpush1.msra.mxu0 %v104
    %152 = vmatprep.subr.mxu0 %v103
    %153 = vmatpush1.msra.mxu0 %v102
    %154 = vmatprep.subr.mxu0 %v101
    %155 = vmatpush1.msra.mxu0 %v100
    %156 = vmatprep.subr.mxu0 %v99
    %157 = vmatpush1.msra.mxu0 %v98
    %158 = vmatprep.subr.mxu0 %v97
    %159 = vmatpush1.msra.mxu0 %v96
    %160 = vmatprep.subr.mxu0 %v95
    %161 = vmatpush1.msra.mxu0 %v94
    %162 = vmatprep.subr.mxu0 %v93
    %163 = vmatpush1.msra.mxu0 %v92
    %164 = vmatprep.subr.mxu0 %v91
    %165 = vmatpush1.msra.mxu0 %v90
    %166 = vmatprep.subr.mxu0 0.0
    %167 = vmatpush2.msra.mxu0 0.0
    %168 = vmatprep.subr.mxu0 0.0
    %169 = vmatpush2.msra.mxu0 0.0
    %170 = vmatprep.subr.mxu0 0.0
    %171 = vmatpush2.msra.mxu0 0.0
    %172 = vmatprep.subr.mxu0 0.0
    %173 = vmatpush2.msra.mxu0 0.0
    %174 = vmatprep.subr.mxu0 0.0
    %175 = vmatpush2.msra.mxu0 0.0
    %176 = vmatprep.subr.mxu0 0.0
    %177 = vmatpush2.msra.mxu0 0.0
    %178 = vmatprep.subr.mxu0 0.0
    %179 = vmatpush2.msra.mxu0 0.0
    %180 = vmatprep.subr.mxu0 0.0
    %181 = vmatpush2.msra.mxu0 0.0
    %182 = vmatprep.subr.mxu0 0.0
    %183 = vmatpush2.msra.mxu0 0.0
    %184 = vmatprep.subr.mxu0 0.0
    %185 = vmatpush2.msra.mxu0 0.0
    %186 = vmatprep.subr.mxu0 0.0
    %187 = vmatpush2.msra.mxu0 0.0
    %188 = vmatprep.subr.mxu0 0.0
    %189 = vmatpush2.msra.mxu0 0.0
    %190 = vmatprep.subr.mxu0 0.0
    %191 = vmatpush2.msra.mxu0 0.0
    %192 = vmatprep.subr.mxu0 0.0
    %193 = vmatpush2.msra.mxu0 0.0
    %194 = vmatprep.subr.mxu0 0.0
    %195 = vmatpush2.msra.mxu0 0.0
    %196 = vmatprep.subr.mxu0 0.0
    %197 = vmatpush2.msra.mxu0 0.0
    %198 = vmatprep.mubr.f32.mxu0 0.0
    %199 = vmatmul.mubr.f32.gmra.mxu0 %v82
    %v200 = vpop.f32.mrf.mxu0
    %v201 = vadd.f32 %v127, %v200
    %v202 = vpop.f32.mrf.mxu0
    %v203 = vadd.f32 %v131, %v202
    %204 = vmatprep.mubr.f32.mxu0 0.0
    %205 = vmatmul.mubr.f32.gmra.mxu0 %v83
    %v206 = vpop.f32.mrf.mxu0
    %v207 = vadd.f32 %v127, %v206
    %v208 = vpop.f32.mrf.mxu0
    %v209 = vadd.f32 %v131, %v208
    %210 = vmatprep.mubr.f32.mxu0 0.0
    %211 = vmatmul.mubr.f32.gmra.mxu0 %v84
    %v212 = vpop.f32.mrf.mxu0
    %v213 = vadd.f32 %v127, %v212
    %v214 = vpop.f32.mrf.mxu0
    %v215 = vadd.f32 %v131, %v214
    %216 = vmatprep.mubr.f32.mxu0 0.0
    %217 = vmatmul.mubr.f32.gmra.mxu0 %v85
    %v218 = vpop.f32.mrf.mxu0
    %v219 = vadd.f32 %v127, %v218
    %v220 = vpop.f32.mrf.mxu0
    %v221 = vadd.f32 %v131, %v220
    %222 = vmatprep.mubr.f32.mxu0 0.0
    %223 = vmatmul.mubr.f32.gmra.mxu0 %v86
    %v224 = vpop.f32.mrf.mxu0
    %v225 = vadd.f32 %v127, %v224
    %v226 = vpop.f32.mrf.mxu0
    %v227 = vadd.f32 %v131, %v226
    %228 = vmatprep.mubr.f32.mxu0 0.0
    %229 = vmatmul.mubr.f32.gmra.mxu0 %v87
    %v230 = vpop.f32.mrf.mxu0
    %v231 = vadd.f32 %v127, %v230
    %v232 = vpop.f32.mrf.mxu0
    %v233 = vadd.f32 %v131, %v232
    %234 = vmatprep.mubr.f32.mxu0 0.0
    %235 = vmatmul.mubr.f32.gmra.mxu0 %v88
    %v236 = vpop.f32.mrf.mxu0
    %v237 = vadd.f32 %v127, %v236
    %v238 = vpop.f32.mrf.mxu0
    %v239 = vadd.f32 %v131, %v238
    %240 = vmatprep.mubr.f32.mxu0 0.0
    %241 = vmatmul.mubr.f32.gmra.mxu0 %v89
    %v242 = vpop.f32.mrf.mxu0
    %v243 = vadd.f32 %v127, %v242
    %v244 = vpop.f32.mrf.mxu0
    %v245 = vadd.f32 %v131, %v244
    %246 = vdwg.mxu0
    %247 = vst [vmem:[#allocation2] sm:$0xff] %v201
    %248 = vst [vmem:[#allocation2 + $0x8] sm:$0xff] %v203
    %249 = vst [vmem:[#allocation2 + $0x10] sm:$0xff] %v207
    %250 = vst [vmem:[#allocation2 + $0x18] sm:$0xff] %v209
    %251 = vst [vmem:[#allocation2 + $0x20] sm:$0xff] %v213
    %252 = vst [vmem:[#allocation2 + $0x28] sm:$0xff] %v215
    %253 = vst [vmem:[#allocation2 + $0x30] sm:$0xff] %v219
    %254 = vst [vmem:[#allocation2 + $0x38] sm:$0xff] %v221
    %255 = vst [vmem:[#allocation2 + $0x40] sm:$0xff] %v225
    %256 = vst [vmem:[#allocation2 + $0x48] sm:$0xff] %v227
    %257 = vst [vmem:[#allocation2 + $0x50] sm:$0xff] %v231
    %258 = vst [vmem:[#allocation2 + $0x58] sm:$0xff] %v233
    %259 = vst [vmem:[#allocation2 + $0x60] sm:$0xff] %v237
    %260 = vst [vmem:[#allocation2 + $0x68] sm:$0xff] %v239
    %261 = vst [vmem:[#allocation2 + $0x70] sm:$0xff] %v243
    %262 = vst [vmem:[#allocation2 + $0x78] sm:$0xff] %v245
    %v263 = vlaneseq
    %v264 = vand.u32 %v263, 127
    %v265 = vadd.s32 %v264, 128
    %vm266 = vcmp.ge.s32.totalorder %v264, 128
    %vm267 = vcmp.ge.s32.totalorder %v265, 128
    %vm268 = vcmp.lt.s32.totalorder %v264, 192
    %vm269 = vcmp.lt.s32.totalorder %v265, 192
    %vm270 = vmand %vm266, %vm268
    %vm271 = vmand %vm267, %vm269
    %v272 = vsel %vm270, 2.0, 1.0
    %v273 = vsel %vm271, 2.0, 1.0
    %v274 = vsel %vm270, -1.0, 0.0
    %v275 = vsel %vm271, -1.0, 0.0
    %v276 = vld [vmem:[%s4] sm:$0x3]
    %v278 = vlaneseq
    %v279 = vshrl.u32 %v278, 7
    %v280 = vsub.s32 0, %v279
    %v281 = vrot.slane %v276, %v280
    %v282 = vlaneseq
    %v283 = vshrl.u32 %v282, 7
    %v284 = vsub.s32 1, %v283
    %v285 = vrot.slane %v276, %v284
    %v288 = vld [vmem:[#allocation2] sm:$0xff]
    %v289 = vld [vmem:[#allocation2 + $0x8] sm:$0xff]
    %v290 = vadd.f32 %v288, 0.0
    %v291 = vadd.f32 %v289, 0.0
    %v292 = vxor.u32 %v290, 2147483648
    %v293 = vxor.u32 %v291, 2147483648
    %v294 = vmul.f32 %v292, 1.442695
    %v295 = vpow.pop %v294
    %v296 = vmul.f32 %v293, 1.442695
    %v297 = vpow.pop %v296
    %v298 = vadd.f32 %v295, 1.0
    %v299 = vadd.f32 %v297, 1.0
    %v300 = vrcp.pop %v298
    %v301 = vmul.f32 1.0, %v300
    %v302 = vrcp.pop %v299
    %v303 = vmul.f32 1.0, %v302
    %v304 = vmul.f32 %v301, %v272
    %v305 = vmul.f32 %v303, %v273
    %v306 = vadd.f32 %v304, %v274
    %v307 = vadd.f32 %v305, %v275
    %v308 = vmul.f32 %v306, 0.0
    %v309 = vmul.f32 %v306, %v307
    %311 = vrot.lane.b32.xlu0 %v309, 64
    %v312 = vpop.permute.xlu0 %311
    %v314 = vadd.f32 %v308, %v312
    %v315 = vtanh.pop %v314
    %v316 = vmul.f32 %v307, %v315
    %318 = vrot.lane.b32.xlu0 %v316, 64
    %v319 = vpop.permute.xlu0 %318
    %vm321 = vcmask 523264
    %v322 = vsel %vm321, %v319, 0.0
    %v323 = vld [vmem:[#allocation8] sm:$0xff]
    %v324 = vld [vmem:[#allocation8 + $0x8] sm:$0xff]
    %v325 = vld [vmem:[#allocation8 + $0x10] sm:$0xff]
    %v326 = vld [vmem:[#allocation8 + $0x18] sm:$0xff]
    %v327 = vld [vmem:[#allocation8 + $0x20] sm:$0xff]
    %v328 = vld [vmem:[#allocation8 + $0x28] sm:$0xff]
    %v329 = vld [vmem:[#allocation8 + $0x30] sm:$0xff]
    %v330 = vld [vmem:[#allocation8 + $0x38] sm:$0xff]
    %v331 = vld [vmem:[#allocation8 + $0x40] sm:$0xff]
    %v332 = vld [vmem:[#allocation8 + $0x48] sm:$0xff]
    %v333 = vld [vmem:[#allocation8 + $0x50] sm:$0xff]
    %v334 = vld [vmem:[#allocation8 + $0x58] sm:$0xff]
    %v335 = vld [vmem:[#allocation8 + $0x60] sm:$0xff]
    %v336 = vld [vmem:[#allocation8 + $0x68] sm:$0xff]
    %v337 = vld [vmem:[#allocation8 + $0x70] sm:$0xff]
    %v338 = vld [vmem:[#allocation8 + $0x78] sm:$0xff]
    %v339 = vld [vmem:[#allocation8 + $0x80] sm:$0xff]
    %v340 = vld [vmem:[#allocation8 + $0x88] sm:$0xff]
    %v341 = vld [vmem:[#allocation8 + $0x90] sm:$0xff]
    %v342 = vld [vmem:[#allocation8 + $0x98] sm:$0xff]
    %v343 = vld [vmem:[#allocation8 + $0xa0] sm:$0xff]
    %v344 = vld [vmem:[#allocation8 + $0xa8] sm:$0xff]
    %v345 = vld [vmem:[#allocation8 + $0xb0] sm:$0xff]
    %v346 = vld [vmem:[#allocation8 + $0xb8] sm:$0xff]
    %v347 = vld [vmem:[#allocation8 + $0xc0] sm:$0xff]
    %v348 = vld [vmem:[#allocation8 + $0xc8] sm:$0xff]
    %v349 = vld [vmem:[#allocation8 + $0xd0] sm:$0xff]
    %v350 = vld [vmem:[#allocation8 + $0xd8] sm:$0xff]
    %v351 = vld [vmem:[#allocation8 + $0xe0] sm:$0xff]
    %v352 = vld [vmem:[#allocation8 + $0xe8] sm:$0xff]
    %v353 = vld [vmem:[#allocation8 + $0xf0] sm:$0xff]
    %v354 = vld [vmem:[#allocation8 + $0xf8] sm:$0xff]
    %v355 = vld [vmem:[#allocation8 + $0x100] sm:$0xff]
    %v356 = vld [vmem:[#allocation8 + $0x108] sm:$0xff]
    %v357 = vld [vmem:[#allocation8 + $0x110] sm:$0xff]
    %v358 = vld [vmem:[#allocation8 + $0x118] sm:$0xff]
    %v359 = vld [vmem:[#allocation8 + $0x120] sm:$0xff]
    %v360 = vld [vmem:[#allocation8 + $0x128] sm:$0xff]
    %v361 = vld [vmem:[#allocation8 + $0x130] sm:$0xff]
    %v362 = vld [vmem:[#allocation8 + $0x138] sm:$0xff]
    %v363 = vld [vmem:[#allocation8 + $0x140] sm:$0xff]
    %v364 = vld [vmem:[#allocation8 + $0x148] sm:$0xff]
    %v365 = vld [vmem:[#allocation8 + $0x150] sm:$0xff]
    %v366 = vld [vmem:[#allocation8 + $0x158] sm:$0xff]
    %v367 = vld [vmem:[#allocation8 + $0x160] sm:$0xff]
    %v368 = vld [vmem:[#allocation8 + $0x168] sm:$0xff]
    %v369 = vld [vmem:[#allocation8 + $0x170] sm:$0xff]
    %v370 = vld [vmem:[#allocation8 + $0x178] sm:$0xff]
    %v371 = vld [vmem:[#allocation8 + $0x180] sm:$0xff]
    %v372 = vld [vmem:[#allocation8 + $0x188] sm:$0xff]
    %v373 = vld [vmem:[#allocation8 + $0x190] sm:$0xff]
    %v374 = vld [vmem:[#allocation8 + $0x198] sm:$0xff]
    %v375 = vld [vmem:[#allocation8 + $0x1a0] sm:$0xff]
    %v376 = vld [vmem:[#allocation8 + $0x1a8] sm:$0xff]
    %v377 = vld [vmem:[#allocation8 + $0x1b0] sm:$0xff]
    %v378 = vld [vmem:[#allocation8 + $0x1b8] sm:$0xff]
    %v379 = vld [vmem:[#allocation8 + $0x1c0] sm:$0xff]
    %v380 = vld [vmem:[#allocation8 + $0x1c8] sm:$0xff]
    %v381 = vld [vmem:[#allocation8 + $0x1d0] sm:$0xff]
    %v382 = vld [vmem:[#allocation8 + $0x1d8] sm:$0xff]
    %v383 = vld [vmem:[#allocation8 + $0x1e0] sm:$0xff]
    %v384 = vld [vmem:[#allocation8 + $0x1e8] sm:$0xff]
    %v385 = vld [vmem:[#allocation8 + $0x1f0] sm:$0xff]
    %v386 = vld [vmem:[#allocation8 + $0x1f8] sm:$0xff]
    %387 = vmatprep.subr.mxu0 %v384
    %388 = vmatpush1.msra.mxu0 %v383
    %389 = vmatprep.subr.mxu0 %v380
    %390 = vmatpush1.msra.mxu0 %v379
    %391 = vmatprep.subr.mxu0 %v376
    %392 = vmatpush1.msra.mxu0 %v375
    %393 = vmatprep.subr.mxu0 %v372
    %394 = vmatpush1.msra.mxu0 %v371
    %395 = vmatprep.subr.mxu0 %v368
    %396 = vmatpush1.msra.mxu0 %v367
    %397 = vmatprep.subr.mxu0 %v364
    %398 = vmatpush1.msra.mxu0 %v363
    %399 = vmatprep.subr.mxu0 %v360
    %400 = vmatpush1.msra.mxu0 %v359
    %401 = vmatprep.subr.mxu0 %v356
    %402 = vmatpush1.msra.mxu0 %v355
    %403 = vmatprep.subr.mxu0 %v352
    %404 = vmatpush1.msra.mxu0 %v351
    %405 = vmatprep.subr.mxu0 %v348
    %406 = vmatpush1.msra.mxu0 %v347
    %407 = vmatprep.subr.mxu0 %v344
    %408 = vmatpush1.msra.mxu0 %v343
    %409 = vmatprep.subr.mxu0 %v340
    %410 = vmatpush1.msra.mxu0 %v339
    %411 = vmatprep.subr.mxu0 %v336
    %412 = vmatpush1.msra.mxu0 %v335
    %413 = vmatprep.subr.mxu0 %v332
    %414 = vmatpush1.msra.mxu0 %v331
    %415 = vmatprep.subr.mxu0 %v328
    %416 = vmatpush1.msra.mxu0 %v327
    %417 = vmatprep.subr.mxu0 %v324
    %418 = vmatpush1.msra.mxu0 %v323
    %419 = vmatprep.subr.mxu0 0.0
    %420 = vmatpush2.msra.mxu0 0.0
    %421 = vmatprep.subr.mxu0 0.0
    %422 = vmatpush2.msra.mxu0 0.0
    %423 = vmatprep.subr.mxu0 0.0
    %424 = vmatpush2.msra.mxu0 0.0
    %425 = vmatprep.subr.mxu0 0.0
    %426 = vmatpush2.msra.mxu0 0.0
    %427 = vmatprep.subr.mxu0 0.0
    %428 = vmatpush2.msra.mxu0 0.0
    %429 = vmatprep.subr.mxu0 0.0
    %430 = vmatpush2.msra.mxu0 0.0
    %431 = vmatprep.subr.mxu0 0.0
    %432 = vmatpush2.msra.mxu0 0.0
    %433 = vmatprep.subr.mxu0 0.0
    %434 = vmatpush2.msra.mxu0 0.0
    %435 = vmatprep.subr.mxu0 0.0
    %436 = vmatpush2.msra.mxu0 0.0
    %437 = vmatprep.subr.mxu0 0.0
    %438 = vmatpush2.msra.mxu0 0.0
    %439 = vmatprep.subr.mxu0 0.0
    %440 = vmatpush2.msra.mxu0 0.0
    %441 = vmatprep.subr.mxu0 0.0
    %442 = vmatpush2.msra.mxu0 0.0
    %443 = vmatprep.subr.mxu0 0.0
    %444 = vmatpush2.msra.mxu0 0.0
    %445 = vmatprep.subr.mxu0 0.0
    %446 = vmatpush2.msra.mxu0 0.0
    %447 = vmatprep.subr.mxu0 0.0
    %448 = vmatpush2.msra.mxu0 0.0
    %449 = vmatprep.subr.mxu0 0.0
    %450 = vmatpush2.msra.mxu0 0.0
    %451 = vmatprep.mubr.f32.mxu0 0.0
    %452 = vmatmul.mubr.f32.gmra.mxu0 %v322
    %v453 = vpop.f32.mrf.mxu0
    %v454 = vadd.f32 0.0, %v453
    %v455 = vpop.f32.mrf.mxu0
    %v456 = vadd.f32 0.0, %v455
    %457 = vdwg.mxu0
    %458 = vmatprep.subr.mxu0 %v386
    %459 = vmatpush1.msra.mxu0 %v385
    %460 = vmatprep.subr.mxu0 %v382
    %461 = vmatpush1.msra.mxu0 %v381
    %462 = vmatprep.subr.mxu0 %v378
    %463 = vmatpush1.msra.mxu0 %v377
    %464 = vmatprep.subr.mxu0 %v374
    %465 = vmatpush1.msra.mxu0 %v373
    %466 = vmatprep.subr.mxu0 %v370
    %467 = vmatpush1.msra.mxu0 %v369
    %468 = vmatprep.subr.mxu0 %v366
    %469 = vmatpush1.msra.mxu0 %v365
    %470 = vmatprep.subr.mxu0 %v362
    %471 = vmatpush1.msra.mxu0 %v361
    %472 = vmatprep.subr.mxu0 %v358
    %473 = vmatpush1.msra.mxu0 %v357
    %474 = vmatprep.subr.mxu0 %v354
    %475 = vmatpush1.msra.mxu0 %v353
    %476 = vmatprep.subr.mxu0 %v350
    %477 = vmatpush1.msra.mxu0 %v349
    %478 = vmatprep.subr.mxu0 %v346
    %479 = vmatpush1.msra.mxu0 %v345
    %480 = vmatprep.subr.mxu0 %v342
    %481 = vmatpush1.msra.mxu0 %v341
    %482 = vmatprep.subr.mxu0 %v338
    %483 = vmatpush1.msra.mxu0 %v337
    %484 = vmatprep.subr.mxu0 %v334
    %485 = vmatpush1.msra.mxu0 %v333
    %486 = vmatprep.subr.mxu0 %v330
    %487 = vmatpush1.msra.mxu0 %v329
    %488 = vmatprep.subr.mxu0 %v326
    %489 = vmatpush1.msra.mxu0 %v325
    %490 = vmatprep.subr.mxu0 0.0
    %491 = vmatpush2.msra.mxu0 0.0
    %492 = vmatprep.subr.mxu0 0.0
    %493 = vmatpush2.msra.mxu0 0.0
    %494 = vmatprep.subr.mxu0 0.0
    %495 = vmatpush2.msra.mxu0 0.0
    %496 = vmatprep.subr.mxu0 0.0
    %497 = vmatpush2.msra.mxu0 0.0
    %498 = vmatprep.subr.mxu0 0.0
    %499 = vmatpush2.msra.mxu0 0.0
    %500 = vmatprep.subr.mxu0 0.0
    %501 = vmatpush2.msra.mxu0 0.0
    %502 = vmatprep.subr.mxu0 0.0
    %503 = vmatpush2.msra.mxu0 0.0
    %504 = vmatprep.subr.mxu0 0.0
    %505 = vmatpush2.msra.mxu0 0.0
    %506 = vmatprep.subr.mxu0 0.0
    %507 = vmatpush2.msra.mxu0 0.0
    %508 = vmatprep.subr.mxu0 0.0
    %509 = vmatpush2.msra.mxu0 0.0
    %510 = vmatprep.subr.mxu0 0.0
    %511 = vmatpush2.msra.mxu0 0.0
    %512 = vmatprep.subr.mxu0 0.0
    %513 = vmatpush2.msra.mxu0 0.0
    %514 = vmatprep.subr.mxu0 0.0
    %515 = vmatpush2.msra.mxu0 0.0
    %516 = vmatprep.subr.mxu0 0.0
    %517 = vmatpush2.msra.mxu0 0.0
    %518 = vmatprep.subr.mxu0 0.0
    %519 = vmatpush2.msra.mxu0 0.0
    %520 = vmatprep.subr.mxu0 0.0
    %521 = vmatpush2.msra.mxu0 0.0
    %522 = vmatprep.mubr.f32.mxu0 0.0
    %523 = vmatmul.mubr.f32.gmra.mxu0 %v322
    %v524 = vpop.f32.mrf.mxu0
    %v525 = vadd.f32 0.0, %v524
    %v526 = vpop.f32.mrf.mxu0
    %v527 = vadd.f32 0.0, %v526
    %528 = vdwg.mxu0
    %v529 = vadd.f32 %v454, %v281
    %v530 = vadd.f32 %v456, %v285
    %v531 = vxor.u32 %v529, 2147483648
    %v532 = vxor.u32 %v530, 2147483648
    %v533 = vmul.f32 %v531, 1.442695
    %v534 = vpow.pop %v533
    %v535 = vmul.f32 %v532, 1.442695
    %v536 = vpow.pop %v535
    %v537 = vadd.f32 %v534, 1.0
    %v538 = vadd.f32 %v536, 1.0
    %v539 = vrcp.pop %v537
    %v540 = vmul.f32 1.0, %v539
    %v541 = vrcp.pop %v538
    %v542 = vmul.f32 1.0, %v541
    %v543 = vmul.f32 %v540, %v272
    %v544 = vmul.f32 %v542, %v273
    %v545 = vadd.f32 %v543, %v274
    %v546 = vadd.f32 %v544, %v275
    %v547 = vmul.f32 %v545, 0.0
    %v548 = vmul.f32 %v545, %v546
    %550 = vrot.lane.b32.xlu0 %v548, 64
    %v551 = vpop.permute.xlu0 %550
    %v553 = vadd.f32 %v547, %v551
    %v554 = vtanh.pop %v553
    %v555 = vmul.f32 %v546, %v554
    %s556 = scalar_lea.vmem [#allocation2], 16
    %v557 = vld [vmem:[%s556] sm:$0xff]
    %v558 = vld [vmem:[%s556 + $0x8] sm:$0xff]
    %v559 = vadd.f32 %v557, %v525
    %v560 = vadd.f32 %v558, %v527
    %v561 = vxor.u32 %v559, 2147483648
    %v562 = vxor.u32 %v560, 2147483648
    %v563 = vmul.f32 %v561, 1.442695
    %v564 = vpow.pop %v563
    %v565 = vmul.f32 %v562, 1.442695
    %v566 = vpow.pop %v565
    %v567 = vadd.f32 %v564, 1.0
    %v568 = vadd.f32 %v566, 1.0
    %v569 = vrcp.pop %v567
    %v570 = vmul.f32 1.0, %v569
    %v571 = vrcp.pop %v568
    %v572 = vmul.f32 1.0, %v571
    %v573 = vmul.f32 %v570, %v272
    %v574 = vmul.f32 %v572, %v273
    %v575 = vadd.f32 %v573, %v274
    %v576 = vadd.f32 %v574, %v275
    %v577 = vmul.f32 %v575, %v314
    %v578 = vmul.f32 %v575, %v576
    %580 = vrot.lane.b32.xlu0 %v578, 64
    %v581 = vpop.permute.xlu0 %580
    %v583 = vadd.f32 %v577, %v581
    %v584 = vtanh.pop %v583
    %v585 = vmul.f32 %v576, %v584
    %587 = vrot.lane.b32.xlu0 %v585, 64
    %v588 = vpop.permute.xlu0 %587
    %v590 = vsel %vm321, %v588, %v555
    %591 = vmatprep.subr.mxu0 %v384
    %592 = vmatpush1.msra.mxu0 %v383
    %593 = vmatprep.subr.mxu0 %v380
    %594 = vmatpush1.msra.mxu0 %v379
    %595 = vmatprep.subr.mxu0 %v376
    %596 = vmatpush1.msra.mxu0 %v375
    %597 = vmatprep.subr.mxu0 %v372
    %598 = vmatpush1.msra.mxu0 %v371
    %599 = vmatprep.subr.mxu0 %v368
    %600 = vmatpush1.msra.mxu0 %v367
    %601 = vmatprep.subr.mxu0 %v364
    %602 = vmatpush1.msra.mxu0 %v363
    %603 = vmatprep.subr.mxu0 %v360
    %604 = vmatpush1.msra.mxu0 %v359
    %605 = vmatprep.subr.mxu0 %v356
    %606 = vmatpush1.msra.mxu0 %v355
    %607 = vmatprep.subr.mxu0 %v352
    %608 = vmatpush1.msra.mxu0 %v351
    %609 = vmatprep.subr.mxu0 %v348
    %610 = vmatpush1.msra.mxu0 %v347
    %611 = vmatprep.subr.mxu0 %v344
    %612 = vmatpush1.msra.mxu0 %v343
    %613 = vmatprep.subr.mxu0 %v340
    %614 = vmatpush1.msra.mxu0 %v339
    %615 = vmatprep.subr.mxu0 %v336
    %616 = vmatpush1.msra.mxu0 %v335
    %617 = vmatprep.subr.mxu0 %v332
    %618 = vmatpush1.msra.mxu0 %v331
    %619 = vmatprep.subr.mxu0 %v328
    %620 = vmatpush1.msra.mxu0 %v327
    %621 = vmatprep.subr.mxu0 %v324
    %622 = vmatpush1.msra.mxu0 %v323
    %623 = vmatprep.subr.mxu0 0.0
    %624 = vmatpush2.msra.mxu0 0.0
    %625 = vmatprep.subr.mxu0 0.0
    %626 = vmatpush2.msra.mxu0 0.0
    %627 = vmatprep.subr.mxu0 0.0
    %628 = vmatpush2.msra.mxu0 0.0
    %629 = vmatprep.subr.mxu0 0.0
    %630 = vmatpush2.msra.mxu0 0.0
    %631 = vmatprep.subr.mxu0 0.0
    %632 = vmatpush2.msra.mxu0 0.0
    %633 = vmatprep.subr.mxu0 0.0
    %634 = vmatpush2.msra.mxu0 0.0
    %635 = vmatprep.subr.mxu0 0.0
    %636 = vmatpush2.msra.mxu0 0.0
    %637 = vmatprep.subr.mxu0 0.0
    %638 = vmatpush2.msra.mxu0 0.0
    %639 = vmatprep.subr.mxu0 0.0
    %640 = vmatpush2.msra.mxu0 0.0
    %641 = vmatprep.subr.mxu0 0.0
    %642 = vmatpush2.msra.mxu0 0.0
    %643 = vmatprep.subr.mxu0 0.0
    %644 = vmatpush2.msra.mxu0 0.0
    %645 = vmatprep.subr.mxu0 0.0
    %646 = vmatpush2.msra.mxu0 0.0
    %647 = vmatprep.subr.mxu0 0.0
    %648 = vmatpush2.msra.mxu0 0.0
    %649 = vmatprep.subr.mxu0 0.0
    %650 = vmatpush2.msra.mxu0 0.0
    %651 = vmatprep.subr.mxu0 0.0
    %652 = vmatpush2.msra.mxu0 0.0
    %653 = vmatprep.subr.mxu0 0.0
    %654 = vmatpush2.msra.mxu0 0.0
    %655 = vmatprep.mubr.f32.mxu0 0.0
    %656 = vmatmul.mubr.f32.gmra.mxu0 %v590
    %v657 = vpop.f32.mrf.mxu0
    %v658 = vadd.f32 0.0, %v657
    %v659 = vpop.f32.mrf.mxu0
    %v660 = vadd.f32 0.0, %v659
    %661 = vdwg.mxu0
    %662 = vmatprep.subr.mxu0 %v386
    %663 = vmatpush1.msra.mxu0 %v385
    %664 = vmatprep.subr.mxu0 %v382
    %665 = vmatpush1.msra.mxu0 %v381
    %666 = vmatprep.subr.mxu0 %v378
    %667 = vmatpush1.msra.mxu0 %v377
    %668 = vmatprep.subr.mxu0 %v374
    %669 = vmatpush1.msra.mxu0 %v373
    %670 = vmatprep.subr.mxu0 %v370
    %671 = vmatpush1.msra.mxu0 %v369
    %672 = vmatprep.subr.mxu0 %v366
    %673 = vmatpush1.msra.mxu0 %v365
    %674 = vmatprep.subr.mxu0 %v362
    %675 = vmatpush1.msra.mxu0 %v361
    %676 = vmatprep.subr.mxu0 %v358
    %677 = vmatpush1.msra.mxu0 %v357
    %678 = vmatprep.subr.mxu0 %v354
    %679 = vmatpush1.msra.mxu0 %v353
    %680 = vmatprep.subr.mxu0 %v350
    %681 = vmatpush1.msra.mxu0 %v349
    %682 = vmatprep.subr.mxu0 %v346
    %683 = vmatpush1.msra.mxu0 %v345
    %684 = vmatprep.subr.mxu0 %v342
    %685 = vmatpush1.msra.mxu0 %v341
    %686 = vmatprep.subr.mxu0 %v338
    %687 = vmatpush1.msra.mxu0 %v337
    %688 = vmatprep.subr.mxu0 %v334
    %689 = vmatpush1.msra.mxu0 %v333
    %690 = vmatprep.subr.mxu0 %v330
    %691 = vmatpush1.msra.mxu0 %v329
    %692 = vmatprep.subr.mxu0 %v326
    %693 = vmatpush1.msra.mxu0 %v325
    %694 = vmatprep.subr.mxu0 0.0
    %695 = vmatpush2.msra.mxu0 0.0
    %696 = vmatprep.subr.mxu0 0.0
    %697 = vmatpush2.msra.mxu0 0.0
    %698 = vmatprep.subr.mxu0 0.0
    %699 = vmatpush2.msra.mxu0 0.0
    %700 = vmatprep.subr.mxu0 0.0
    %701 = vmatpush2.msra.mxu0 0.0
    %702 = vmatprep.subr.mxu0 0.0
    %703 = vmatpush2.msra.mxu0 0.0
    %704 = vmatprep.subr.mxu0 0.0
    %705 = vmatpush2.msra.mxu0 0.0
    %706 = vmatprep.subr.mxu0 0.0
    %707 = vmatpush2.msra.mxu0 0.0
    %708 = vmatprep.subr.mxu0 0.0
    %709 = vmatpush2.msra.mxu0 0.0
    %710 = vmatprep.subr.mxu0 0.0
    %711 = vmatpush2.msra.mxu0 0.0
    %712 = vmatprep.subr.mxu0 0.0
    %713 = vmatpush2.msra.mxu0 0.0
    %714 = vmatprep.subr.mxu0 0.0
    %715 = vmatpush2.msra.mxu0 0.0
    %716 = vmatprep.subr.mxu0 0.0
    %717 = vmatpush2.msra.mxu0 0.0
    %718 = vmatprep.subr.mxu0 0.0
    %719 = vmatpush2.msra.mxu0 0.0
    %720 = vmatprep.subr.mxu0 0.0
    %721 = vmatpush2.msra.mxu0 0.0
    %722 = vmatprep.subr.mxu0 0.0
    %723 = vmatpush2.msra.mxu0 0.0
    %724 = vmatprep.subr.mxu0 0.0
    %725 = vmatpush2.msra.mxu0 0.0
    %726 = vmatprep.mubr.f32.mxu0 0.0
    %727 = vmatmul.mubr.f32.gmra.mxu0 %v590
    %v728 = vpop.f32.mrf.mxu0
    %v729 = vadd.f32 0.0, %v728
    %v730 = vpop.f32.mrf.mxu0
    %v731 = vadd.f32 0.0, %v730
    %732 = vdwg.mxu0
    %v733 = vadd.f32 %v658, %v281
    %v734 = vadd.f32 %v660, %v285
    %v735 = vxor.u32 %v733, 2147483648
    %v736 = vxor.u32 %v734, 2147483648
    %v737 = vmul.f32 %v735, 1.442695
    %v738 = vpow.pop %v737
    %v739 = vmul.f32 %v736, 1.442695
    %v740 = vpow.pop %v739
    %v741 = vadd.f32 %v738, 1.0
    %v742 = vadd.f32 %v740, 1.0
    %v743 = vrcp.pop %v741
    %v744 = vmul.f32 1.0, %v743
    %v745 = vrcp.pop %v742
    %v746 = vmul.f32 1.0, %v745
    %v747 = vmul.f32 %v744, %v272
    %v748 = vmul.f32 %v746, %v273
    %v749 = vadd.f32 %v747, %v274
    %v750 = vadd.f32 %v748, %v275
    %v751 = vmul.f32 %v749, %v553
    %v752 = vmul.f32 %v749, %v750
    %754 = vrot.lane.b32.xlu0 %v752, 64
    %v755 = vpop.permute.xlu0 %754
    %v757 = vadd.f32 %v751, %v755
    %v758 = vtanh.pop %v757
    %v759 = vmul.f32 %v750, %v758
    %s760 = scalar_lea.vmem [#allocation2], 32
    %v761 = vld [vmem:[%s760] sm:$0xff]
    %v762 = vld [vmem:[%s760 + $0x8] sm:$0xff]
    %v763 = vadd.f32 %v761, %v729
    %v764 = vadd.f32 %v762, %v731
    %v765 = vxor.u32 %v763, 2147483648
    %v766 = vxor.u32 %v764, 2147483648
    %v767 = vmul.f32 %v765, 1.442695
    %v768 = vpow.pop %v767
    %v769 = vmul.f32 %v766, 1.442695
    %v770 = vpow.pop %v769
    %v771 = vadd.f32 %v768, 1.0
    %v772 = vadd.f32 %v770, 1.0
    %v773 = vrcp.pop %v771
    %v774 = vmul.f32 1.0, %v773
    %v775 = vrcp.pop %v772
    %v776 = vmul.f32 1.0, %v775
    %v777 = vmul.f32 %v774, %v272
    %v778 = vmul.f32 %v776, %v273
    %v779 = vadd.f32 %v777, %v274
    %v780 = vadd.f32 %v778, %v275
    %v781 = vmul.f32 %v779, %v583
    %v782 = vmul.f32 %v779, %v780
    %784 = vrot.lane.b32.xlu0 %v782, 64
    %v785 = vpop.permute.xlu0 %784
    %v787 = vadd.f32 %v781, %v785
    %v788 = vtanh.pop %v787
    %v789 = vmul.f32 %v780, %v788
    %791 = vrot.lane.b32.xlu0 %v789, 64
    %v792 = vpop.permute.xlu0 %791
    %v794 = vsel %vm321, %v792, %v759
    %795 = vmatprep.subr.mxu0 %v384
    %796 = vmatpush1.msra.mxu0 %v383
    %797 = vmatprep.subr.mxu0 %v380
    %798 = vmatpush1.msra.mxu0 %v379
    %799 = vmatprep.subr.mxu0 %v376
    %800 = vmatpush1.msra.mxu0 %v375
    %801 = vmatprep.subr.mxu0 %v372
    %802 = vmatpush1.msra.mxu0 %v371
    %803 = vmatprep.subr.mxu0 %v368
    %804 = vmatpush1.msra.mxu0 %v367
    %805 = vmatprep.subr.mxu0 %v364
    %806 = vmatpush1.msra.mxu0 %v363
    %807 = vmatprep.subr.mxu0 %v360
    %808 = vmatpush1.msra.mxu0 %v359
    %809 = vmatprep.subr.mxu0 %v356
    %810 = vmatpush1.msra.mxu0 %v355
    %811 = vmatprep.subr.mxu0 %v352
    %812 = vmatpush1.msra.mxu0 %v351
    %813 = vmatprep.subr.mxu0 %v348
    %814 = vmatpush1.msra.mxu0 %v347
    %815 = vmatprep.subr.mxu0 %v344
    %816 = vmatpush1.msra.mxu0 %v343
    %817 = vmatprep.subr.mxu0 %v340
    %818 = vmatpush1.msra.mxu0 %v339
    %819 = vmatprep.subr.mxu0 %v336
    %820 = vmatpush1.msra.mxu0 %v335
    %821 = vmatprep.subr.mxu0 %v332
    %822 = vmatpush1.msra.mxu0 %v331
    %823 = vmatprep.subr.mxu0 %v328
    %824 = vmatpush1.msra.mxu0 %v327
    %825 = vmatprep.subr.mxu0 %v324
    %826 = vmatpush1.msra.mxu0 %v323
    %827 = vmatprep.subr.mxu0 0.0
    %828 = vmatpush2.msra.mxu0 0.0
    %829 = vmatprep.subr.mxu0 0.0
    %830 = vmatpush2.msra.mxu0 0.0
    %831 = vmatprep.subr.mxu0 0.0
    %832 = vmatpush2.msra.mxu0 0.0
    %833 = vmatprep.subr.mxu0 0.0
    %834 = vmatpush2.msra.mxu0 0.0
    %835 = vmatprep.subr.mxu0 0.0
    %836 = vmatpush2.msra.mxu0 0.0
    %837 = vmatprep.subr.mxu0 0.0
    %838 = vmatpush2.msra.mxu0 0.0
    %839 = vmatprep.subr.mxu0 0.0
    %840 = vmatpush2.msra.mxu0 0.0
    %841 = vmatprep.subr.mxu0 0.0
    %842 = vmatpush2.msra.mxu0 0.0
    %843 = vmatprep.subr.mxu0 0.0
    %844 = vmatpush2.msra.mxu0 0.0
    %845 = vmatprep.subr.mxu0 0.0
    %846 = vmatpush2.msra.mxu0 0.0
    %847 = vmatprep.subr.mxu0 0.0
    %848 = vmatpush2.msra.mxu0 0.0
    %849 = vmatprep.subr.mxu0 0.0
    %850 = vmatpush2.msra.mxu0 0.0
    %851 = vmatprep.subr.mxu0 0.0
    %852 = vmatpush2.msra.mxu0 0.0
    %853 = vmatprep.subr.mxu0 0.0
    %854 = vmatpush2.msra.mxu0 0.0
    %855 = vmatprep.subr.mxu0 0.0
    %856 = vmatpush2.msra.mxu0 0.0
    %857 = vmatprep.subr.mxu0 0.0
    %858 = vmatpush2.msra.mxu0 0.0
    %859 = vmatprep.mubr.f32.mxu0 0.0
    %860 = vmatmul.mubr.f32.gmra.mxu0 %v794
    %v861 = vpop.f32.mrf.mxu0
    %v862 = vadd.f32 0.0, %v861
    %v863 = vpop.f32.mrf.mxu0
    %v864 = vadd.f32 0.0, %v863
    %865 = vdwg.mxu0
    %866 = vmatprep.subr.mxu0 %v386
    %867 = vmatpush1.msra.mxu0 %v385
    %868 = vmatprep.subr.mxu0 %v382
    %869 = vmatpush1.msra.mxu0 %v381
    %870 = vmatprep.subr.mxu0 %v378
    %871 = vmatpush1.msra.mxu0 %v377
    %872 = vmatprep.subr.mxu0 %v374
    %873 = vmatpush1.msra.mxu0 %v373
    %874 = vmatprep.subr.mxu0 %v370
    %875 = vmatpush1.msra.mxu0 %v369
    %876 = vmatprep.subr.mxu0 %v366
    %877 = vmatpush1.msra.mxu0 %v365
    %878 = vmatprep.subr.mxu0 %v362
    %879 = vmatpush1.msra.mxu0 %v361
    %880 = vmatprep.subr.mxu0 %v358
    %881 = vmatpush1.msra.mxu0 %v357
    %882 = vmatprep.subr.mxu0 %v354
    %883 = vmatpush1.msra.mxu0 %v353
    %884 = vmatprep.subr.mxu0 %v350
    %885 = vmatpush1.msra.mxu0 %v349
    %886 = vmatprep.subr.mxu0 %v346
    %887 = vmatpush1.msra.mxu0 %v345
    %888 = vmatprep.subr.mxu0 %v342
    %889 = vmatpush1.msra.mxu0 %v341
    %890 = vmatprep.subr.mxu0 %v338
    %891 = vmatpush1.msra.mxu0 %v337
    %892 = vmatprep.subr.mxu0 %v334
    %893 = vmatpush1.msra.mxu0 %v333
    %894 = vmatprep.subr.mxu0 %v330
    %895 = vmatpush1.msra.mxu0 %v329
    %896 = vmatprep.subr.mxu0 %v326
    %897 = vmatpush1.msra.mxu0 %v325
    %898 = vmatprep.subr.mxu0 0.0
    %899 = vmatpush2.msra.mxu0 0.0
    %900 = vmatprep.subr.mxu0 0.0
    %901 = vmatpush2.msra.mxu0 0.0
    %902 = vmatprep.subr.mxu0 0.0
    %903 = vmatpush2.msra.mxu0 0.0
    %904 = vmatprep.subr.mxu0 0.0
    %905 = vmatpush2.msra.mxu0 0.0
    %906 = vmatprep.subr.mxu0 0.0
    %907 = vmatpush2.msra.mxu0 0.0
    %908 = vmatprep.subr.mxu0 0.0
    %909 = vmatpush2.msra.mxu0 0.0
    %910 = vmatprep.subr.mxu0 0.0
    %911 = vmatpush2.msra.mxu0 0.0
    %912 = vmatprep.subr.mxu0 0.0
    %913 = vmatpush2.msra.mxu0 0.0
    %914 = vmatprep.subr.mxu0 0.0
    %915 = vmatpush2.msra.mxu0 0.0
    %916 = vmatprep.subr.mxu0 0.0
    %917 = vmatpush2.msra.mxu0 0.0
    %918 = vmatprep.subr.mxu0 0.0
    %919 = vmatpush2.msra.mxu0 0.0
    %920 = vmatprep.subr.mxu0 0.0
    %921 = vmatpush2.msra.mxu0 0.0
    %922 = vmatprep.subr.mxu0 0.0
    %923 = vmatpush2.msra.mxu0 0.0
    %924 = vmatprep.subr.mxu0 0.0
    %925 = vmatpush2.msra.mxu0 0.0
    %926 = vmatprep.subr.mxu0 0.0
    %927 = vmatpush2.msra.mxu0 0.0
    %928 = vmatprep.subr.mxu0 0.0
    %929 = vmatpush2.msra.mxu0 0.0
    %930 = vmatprep.mubr.f32.mxu0 0.0
    %931 = vmatmul.mubr.f32.gmra.mxu0 %v794
    %v932 = vpop.f32.mrf.mxu0
    %v933 = vadd.f32 0.0, %v932
    %v934 = vpop.f32.mrf.mxu0
    %v935 = vadd.f32 0.0, %v934
    %936 = vdwg.mxu0
    %v937 = vadd.f32 %v862, %v281
    %v938 = vadd.f32 %v864, %v285
    %v939 = vxor.u32 %v937, 2147483648
    %v940 = vxor.u32 %v938, 2147483648
    %v941 = vmul.f32 %v939, 1.442695
    %v942 = vpow.pop %v941
    %v943 = vmul.f32 %v940, 1.442695
    %v944 = vpow.pop %v943
    %v945 = vadd.f32 %v942, 1.0
    %v946 = vadd.f32 %v944, 1.0
    %v947 = vrcp.pop %v945
    %v948 = vmul.f32 1.0, %v947
    %v949 = vrcp.pop %v946
    %v950 = vmul.f32 1.0, %v949
    %v951 = vmul.f32 %v948, %v272
    %v952 = vmul.f32 %v950, %v273
    %v953 = vadd.f32 %v951, %v274
    %v954 = vadd.f32 %v952, %v275
    %v955 = vmul.f32 %v953, %v757
    %v956 = vmul.f32 %v953, %v954
    %958 = vrot.lane.b32.xlu0 %v956, 64
    %v959 = vpop.permute.xlu0 %958
    %v961 = vadd.f32 %v955, %v959
    %v962 = vtanh.pop %v961
    %v963 = vmul.f32 %v954, %v962
    %s964 = scalar_lea.vmem [#allocation2], 48
    %v965 = vld [vmem:[%s964] sm:$0xff]
    %v966 = vld [vmem:[%s964 + $0x8] sm:$0xff]
    %v967 = vadd.f32 %v965, %v933
    %v968 = vadd.f32 %v966, %v935
    %v969 = vxor.u32 %v967, 2147483648
    %v970 = vxor.u32 %v968, 2147483648
    %v971 = vmul.f32 %v969, 1.442695
    %v972 = vpow.pop %v971
    %v973 = vmul.f32 %v970, 1.442695
    %v974 = vpow.pop %v973
    %v975 = vadd.f32 %v972, 1.0
    %v976 = vadd.f32 %v974, 1.0
    %v977 = vrcp.pop %v975
    %v978 = vmul.f32 1.0, %v977
    %v979 = vrcp.pop %v976
    %v980 = vmul.f32 1.0, %v979
    %v981 = vmul.f32 %v978, %v272
    %v982 = vmul.f32 %v980, %v273
    %v983 = vadd.f32 %v981, %v274
    %v984 = vadd.f32 %v982, %v275
    %v985 = vmul.f32 %v983, %v787
    %v986 = vmul.f32 %v983, %v984
    %988 = vrot.lane.b32.xlu0 %v986, 64
    %v989 = vpop.permute.xlu0 %988
    %v991 = vadd.f32 %v985, %v989
    %v992 = vtanh.pop %v991
    %v993 = vmul.f32 %v984, %v992
    %995 = vrot.lane.b32.xlu0 %v993, 64
    %v996 = vpop.permute.xlu0 %995
    %v998 = vsel %vm321, %v996, %v963
    %999 = vmatprep.subr.mxu0 %v384
    %1000 = vmatpush1.msra.mxu0 %v383
    %1001 = vmatprep.subr.mxu0 %v380
    %1002 = vmatpush1.msra.mxu0 %v379
    %1003 = vmatprep.subr.mxu0 %v376
    %1004 = vmatpush1.msra.mxu0 %v375
    %1005 = vmatprep.subr.mxu0 %v372
    %1006 = vmatpush1.msra.mxu0 %v371
    %1007 = vmatprep.subr.mxu0 %v368
    %1008 = vmatpush1.msra.mxu0 %v367
    %1009 = vmatprep.subr.mxu0 %v364
    %1010 = vmatpush1.msra.mxu0 %v363
    %1011 = vmatprep.subr.mxu0 %v360
    %1012 = vmatpush1.msra.mxu0 %v359
    %1013 = vmatprep.subr.mxu0 %v356
    %1014 = vmatpush1.msra.mxu0 %v355
    %1015 = vmatprep.subr.mxu0 %v352
    %1016 = vmatpush1.msra.mxu0 %v351
    %1017 = vmatprep.subr.mxu0 %v348
    %1018 = vmatpush1.msra.mxu0 %v347
    %1019 = vmatprep.subr.mxu0 %v344
    %1020 = vmatpush1.msra.mxu0 %v343
    %1021 = vmatprep.subr.mxu0 %v340
    %1022 = vmatpush1.msra.mxu0 %v339
    %1023 = vmatprep.subr.mxu0 %v336
    %1024 = vmatpush1.msra.mxu0 %v335
    %1025 = vmatprep.subr.mxu0 %v332
    %1026 = vmatpush1.msra.mxu0 %v331
    %1027 = vmatprep.subr.mxu0 %v328
    %1028 = vmatpush1.msra.mxu0 %v327
    %1029 = vmatprep.subr.mxu0 %v324
    %1030 = vmatpush1.msra.mxu0 %v323
    %1031 = vmatprep.subr.mxu0 0.0
    %1032 = vmatpush2.msra.mxu0 0.0
    %1033 = vmatprep.subr.mxu0 0.0
    %1034 = vmatpush2.msra.mxu0 0.0
    %1035 = vmatprep.subr.mxu0 0.0
    %1036 = vmatpush2.msra.mxu0 0.0
    %1037 = vmatprep.subr.mxu0 0.0
    %1038 = vmatpush2.msra.mxu0 0.0
    %1039 = vmatprep.subr.mxu0 0.0
    %1040 = vmatpush2.msra.mxu0 0.0
    %1041 = vmatprep.subr.mxu0 0.0
    %1042 = vmatpush2.msra.mxu0 0.0
    %1043 = vmatprep.subr.mxu0 0.0
    %1044 = vmatpush2.msra.mxu0 0.0
    %1045 = vmatprep.subr.mxu0 0.0
    %1046 = vmatpush2.msra.mxu0 0.0
    %1047 = vmatprep.subr.mxu0 0.0
    %1048 = vmatpush2.msra.mxu0 0.0
    %1049 = vmatprep.subr.mxu0 0.0
    %1050 = vmatpush2.msra.mxu0 0.0
    %1051 = vmatprep.subr.mxu0 0.0
    %1052 = vmatpush2.msra.mxu0 0.0
    %1053 = vmatprep.subr.mxu0 0.0
    %1054 = vmatpush2.msra.mxu0 0.0
    %1055 = vmatprep.subr.mxu0 0.0
    %1056 = vmatpush2.msra.mxu0 0.0
    %1057 = vmatprep.subr.mxu0 0.0
    %1058 = vmatpush2.msra.mxu0 0.0
    %1059 = vmatprep.subr.mxu0 0.0
    %1060 = vmatpush2.msra.mxu0 0.0
    %1061 = vmatprep.subr.mxu0 0.0
    %1062 = vmatpush2.msra.mxu0 0.0
    %1063 = vmatprep.mubr.f32.mxu0 0.0
    %1064 = vmatmul.mubr.f32.gmra.mxu0 %v998
    %v1065 = vpop.f32.mrf.mxu0
    %v1066 = vadd.f32 0.0, %v1065
    %v1067 = vpop.f32.mrf.mxu0
    %v1068 = vadd.f32 0.0, %v1067
    %1069 = vdwg.mxu0
    %1070 = vmatprep.subr.mxu0 %v386
    %1071 = vmatpush1.msra.mxu0 %v385
    %1072 = vmatprep.subr.mxu0 %v382
    %1073 = vmatpush1.msra.mxu0 %v381
    %1074 = vmatprep.subr.mxu0 %v378
    %1075 = vmatpush1.msra.mxu0 %v377
    %1076 = vmatprep.subr.mxu0 %v374
    %1077 = vmatpush1.msra.mxu0 %v373
    %1078 = vmatprep.subr.mxu0 %v370
    %1079 = vmatpush1.msra.mxu0 %v369
    %1080 = vmatprep.subr.mxu0 %v366
    %1081 = vmatpush1.msra.mxu0 %v365
    %1082 = vmatprep.subr.mxu0 %v362
    %1083 = vmatpush1.msra.mxu0 %v361
    %1084 = vmatprep.subr.mxu0 %v358
    %1085 = vmatpush1.msra.mxu0 %v357
    %1086 = vmatprep.subr.mxu0 %v354
    %1087 = vmatpush1.msra.mxu0 %v353
    %1088 = vmatprep.subr.mxu0 %v350
    %1089 = vmatpush1.msra.mxu0 %v349
    %1090 = vmatprep.subr.mxu0 %v346
    %1091 = vmatpush1.msra.mxu0 %v345
    %1092 = vmatprep.subr.mxu0 %v342
    %1093 = vmatpush1.msra.mxu0 %v341
    %1094 = vmatprep.subr.mxu0 %v338
    %1095 = vmatpush1.msra.mxu0 %v337
    %1096 = vmatprep.subr.mxu0 %v334
    %1097 = vmatpush1.msra.mxu0 %v333
    %1098 = vmatprep.subr.mxu0 %v330
    %1099 = vmatpush1.msra.mxu0 %v329
    %1100 = vmatprep.subr.mxu0 %v326
    %1101 = vmatpush1.msra.mxu0 %v325
    %1102 = vmatprep.subr.mxu0 0.0
    %1103 = vmatpush2.msra.mxu0 0.0
    %1104 = vmatprep.subr.mxu0 0.0
    %1105 = vmatpush2.msra.mxu0 0.0
    %1106 = vmatprep.subr.mxu0 0.0
    %1107 = vmatpush2.msra.mxu0 0.0
    %1108 = vmatprep.subr.mxu0 0.0
    %1109 = vmatpush2.msra.mxu0 0.0
    %1110 = vmatprep.subr.mxu0 0.0
    %1111 = vmatpush2.msra.mxu0 0.0
    %1112 = vmatprep.subr.mxu0 0.0
    %1113 = vmatpush2.msra.mxu0 0.0
    %1114 = vmatprep.subr.mxu0 0.0
    %1115 = vmatpush2.msra.mxu0 0.0
    %1116 = vmatprep.subr.mxu0 0.0
    %1117 = vmatpush2.msra.mxu0 0.0
    %1118 = vmatprep.subr.mxu0 0.0
    %1119 = vmatpush2.msra.mxu0 0.0
    %1120 = vmatprep.subr.mxu0 0.0
    %1121 = vmatpush2.msra.mxu0 0.0
    %1122 = vmatprep.subr.mxu0 0.0
    %1123 = vmatpush2.msra.mxu0 0.0
    %1124 = vmatprep.subr.mxu0 0.0
    %1125 = vmatpush2.msra.mxu0 0.0
    %1126 = vmatprep.subr.mxu0 0.0
    %1127 = vmatpush2.msra.mxu0 0.0
    %1128 = vmatprep.subr.mxu0 0.0
    %1129 = vmatpush2.msra.mxu0 0.0
    %1130 = vmatprep.subr.mxu0 0.0
    %1131 = vmatpush2.msra.mxu0 0.0
    %1132 = vmatprep.subr.mxu0 0.0
    %1133 = vmatpush2.msra.mxu0 0.0
    %1134 = vmatprep.mubr.f32.mxu0 0.0
    %1135 = vmatmul.mubr.f32.gmra.mxu0 %v998
    %v1136 = vpop.f32.mrf.mxu0
    %v1137 = vadd.f32 0.0, %v1136
    %v1138 = vpop.f32.mrf.mxu0
    %v1139 = vadd.f32 0.0, %v1138
    %1140 = vdwg.mxu0
    %v1141 = vadd.f32 %v1066, %v281
    %v1142 = vadd.f32 %v1068, %v285
    %v1143 = vxor.u32 %v1141, 2147483648
    %v1144 = vxor.u32 %v1142, 2147483648
    %v1145 = vmul.f32 %v1143, 1.442695
    %v1146 = vpow.pop %v1145
    %v1147 = vmul.f32 %v1144, 1.442695
    %v1148 = vpow.pop %v1147
    %v1149 = vadd.f32 %v1146, 1.0
    %v1150 = vadd.f32 %v1148, 1.0
    %v1151 = vrcp.pop %v1149
    %v1152 = vmul.f32 1.0, %v1151
    %v1153 = vrcp.pop %v1150
    %v1154 = vmul.f32 1.0, %v1153
    %v1155 = vmul.f32 %v1152, %v272
    %v1156 = vmul.f32 %v1154, %v273
    %v1157 = vadd.f32 %v1155, %v274
    %v1158 = vadd.f32 %v1156, %v275
    %v1159 = vmul.f32 %v1157, %v961
    %v1160 = vmul.f32 %v1157, %v1158
    %1162 = vrot.lane.b32.xlu0 %v1160, 64
    %v1163 = vpop.permute.xlu0 %1162
    %v1165 = vadd.f32 %v1159, %v1163
    %v1166 = vtanh.pop %v1165
    %v1167 = vmul.f32 %v1158, %v1166
    %s1168 = scalar_lea.vmem [#allocation2], 64
    %v1169 = vld [vmem:[%s1168] sm:$0xff]
    %v1170 = vld [vmem:[%s1168 + $0x8] sm:$0xff]
    %v1171 = vadd.f32 %v1169, %v1137
    %v1172 = vadd.f32 %v1170, %v1139
    %v1173 = vxor.u32 %v1171, 2147483648
    %v1174 = vxor.u32 %v1172, 2147483648
    %v1175 = vmul.f32 %v1173, 1.442695
    %v1176 = vpow.pop %v1175
    %v1177 = vmul.f32 %v1174, 1.442695
    %v1178 = vpow.pop %v1177
    %v1179 = vadd.f32 %v1176, 1.0
    %v1180 = vadd.f32 %v1178, 1.0
    %v1181 = vrcp.pop %v1179
    %v1182 = vmul.f32 1.0, %v1181
    %v1183 = vrcp.pop %v1180
    %v1184 = vmul.f32 1.0, %v1183
    %v1185 = vmul.f32 %v1182, %v272
    %v1186 = vmul.f32 %v1184, %v273
    %v1187 = vadd.f32 %v1185, %v274
    %v1188 = vadd.f32 %v1186, %v275
    %v1189 = vmul.f32 %v1187, %v991
    %v1190 = vmul.f32 %v1187, %v1188
    %1192 = vrot.lane.b32.xlu0 %v1190, 64
    %v1193 = vpop.permute.xlu0 %1192
    %v1195 = vadd.f32 %v1189, %v1193
    %v1196 = vtanh.pop %v1195
    %v1197 = vmul.f32 %v1188, %v1196
    %1199 = vrot.lane.b32.xlu0 %v1197, 64
    %v1200 = vpop.permute.xlu0 %1199
    %v1202 = vsel %vm321, %v1200, %v1167
    %1203 = vmatprep.subr.mxu0 %v384
    %1204 = vmatpush1.msra.mxu0 %v383
    %1205 = vmatprep.subr.mxu0 %v380
    %1206 = vmatpush1.msra.mxu0 %v379
    %1207 = vmatprep.subr.mxu0 %v376
    %1208 = vmatpush1.msra.mxu0 %v375
    %1209 = vmatprep.subr.mxu0 %v372
    %1210 = vmatpush1.msra.mxu0 %v371
    %1211 = vmatprep.subr.mxu0 %v368
    %1212 = vmatpush1.msra.mxu0 %v367
    %1213 = vmatprep.subr.mxu0 %v364
    %1214 = vmatpush1.msra.mxu0 %v363
    %1215 = vmatprep.subr.mxu0 %v360
    %1216 = vmatpush1.msra.mxu0 %v359
    %1217 = vmatprep.subr.mxu0 %v356
    %1218 = vmatpush1.msra.mxu0 %v355
    %1219 = vmatprep.subr.mxu0 %v352
    %1220 = vmatpush1.msra.mxu0 %v351
    %1221 = vmatprep.subr.mxu0 %v348
    %1222 = vmatpush1.msra.mxu0 %v347
    %1223 = vmatprep.subr.mxu0 %v344
    %1224 = vmatpush1.msra.mxu0 %v343
    %1225 = vmatprep.subr.mxu0 %v340
    %1226 = vmatpush1.msra.mxu0 %v339
    %1227 = vmatprep.subr.mxu0 %v336
    %1228 = vmatpush1.msra.mxu0 %v335
    %1229 = vmatprep.subr.mxu0 %v332
    %1230 = vmatpush1.msra.mxu0 %v331
    %1231 = vmatprep.subr.mxu0 %v328
    %1232 = vmatpush1.msra.mxu0 %v327
    %1233 = vmatprep.subr.mxu0 %v324
    %1234 = vmatpush1.msra.mxu0 %v323
    %1235 = vmatprep.subr.mxu0 0.0
    %1236 = vmatpush2.msra.mxu0 0.0
    %1237 = vmatprep.subr.mxu0 0.0
    %1238 = vmatpush2.msra.mxu0 0.0
    %1239 = vmatprep.subr.mxu0 0.0
    %1240 = vmatpush2.msra.mxu0 0.0
    %1241 = vmatprep.subr.mxu0 0.0
    %1242 = vmatpush2.msra.mxu0 0.0
    %1243 = vmatprep.subr.mxu0 0.0
    %1244 = vmatpush2.msra.mxu0 0.0
    %1245 = vmatprep.subr.mxu0 0.0
    %1246 = vmatpush2.msra.mxu0 0.0
    %1247 = vmatprep.subr.mxu0 0.0
    %1248 = vmatpush2.msra.mxu0 0.0
    %1249 = vmatprep.subr.mxu0 0.0
    %1250 = vmatpush2.msra.mxu0 0.0
    %1251 = vmatprep.subr.mxu0 0.0
    %1252 = vmatpush2.msra.mxu0 0.0
    %1253 = vmatprep.subr.mxu0 0.0
    %1254 = vmatpush2.msra.mxu0 0.0
    %1255 = vmatprep.subr.mxu0 0.0
    %1256 = vmatpush2.msra.mxu0 0.0
    %1257 = vmatprep.subr.mxu0 0.0
    %1258 = vmatpush2.msra.mxu0 0.0
    %1259 = vmatprep.subr.mxu0 0.0
    %1260 = vmatpush2.msra.mxu0 0.0
    %1261 = vmatprep.subr.mxu0 0.0
    %1262 = vmatpush2.msra.mxu0 0.0
    %1263 = vmatprep.subr.mxu0 0.0
    %1264 = vmatpush2.msra.mxu0 0.0
    %1265 = vmatprep.subr.mxu0 0.0
    %1266 = vmatpush2.msra.mxu0 0.0
    %1267 = vmatprep.mubr.f32.mxu0 0.0
    %1268 = vmatmul.mubr.f32.gmra.mxu0 %v1202
    %v1269 = vpop.f32.mrf.mxu0
    %v1270 = vadd.f32 0.0, %v1269
    %v1271 = vpop.f32.mrf.mxu0
    %v1272 = vadd.f32 0.0, %v1271
    %1273 = vdwg.mxu0
    %1274 = vmatprep.subr.mxu0 %v386
    %1275 = vmatpush1.msra.mxu0 %v385
    %1276 = vmatprep.subr.mxu0 %v382
    %1277 = vmatpush1.msra.mxu0 %v381
    %1278 = vmatprep.subr.mxu0 %v378
    %1279 = vmatpush1.msra.mxu0 %v377
    %1280 = vmatprep.subr.mxu0 %v374
    %1281 = vmatpush1.msra.mxu0 %v373
    %1282 = vmatprep.subr.mxu0 %v370
    %1283 = vmatpush1.msra.mxu0 %v369
    %1284 = vmatprep.subr.mxu0 %v366
    %1285 = vmatpush1.msra.mxu0 %v365
    %1286 = vmatprep.subr.mxu0 %v362
    %1287 = vmatpush1.msra.mxu0 %v361
    %1288 = vmatprep.subr.mxu0 %v358
    %1289 = vmatpush1.msra.mxu0 %v357
    %1290 = vmatprep.subr.mxu0 %v354
    %1291 = vmatpush1.msra.mxu0 %v353
    %1292 = vmatprep.subr.mxu0 %v350
    %1293 = vmatpush1.msra.mxu0 %v349
    %1294 = vmatprep.subr.mxu0 %v346
    %1295 = vmatpush1.msra.mxu0 %v345
    %1296 = vmatprep.subr.mxu0 %v342
    %1297 = vmatpush1.msra.mxu0 %v341
    %1298 = vmatprep.subr.mxu0 %v338
    %1299 = vmatpush1.msra.mxu0 %v337
    %1300 = vmatprep.subr.mxu0 %v334
    %1301 = vmatpush1.msra.mxu0 %v333
    %1302 = vmatprep.subr.mxu0 %v330
    %1303 = vmatpush1.msra.mxu0 %v329
    %1304 = vmatprep.subr.mxu0 %v326
    %1305 = vmatpush1.msra.mxu0 %v325
    %1306 = vmatprep.subr.mxu0 0.0
    %1307 = vmatpush2.msra.mxu0 0.0
    %1308 = vmatprep.subr.mxu0 0.0
    %1309 = vmatpush2.msra.mxu0 0.0
    %1310 = vmatprep.subr.mxu0 0.0
    %1311 = vmatpush2.msra.mxu0 0.0
    %1312 = vmatprep.subr.mxu0 0.0
    %1313 = vmatpush2.msra.mxu0 0.0
    %1314 = vmatprep.subr.mxu0 0.0
    %1315 = vmatpush2.msra.mxu0 0.0
    %1316 = vmatprep.subr.mxu0 0.0
    %1317 = vmatpush2.msra.mxu0 0.0
    %1318 = vmatprep.subr.mxu0 0.0
    %1319 = vmatpush2.msra.mxu0 0.0
    %1320 = vmatprep.subr.mxu0 0.0
    %1321 = vmatpush2.msra.mxu0 0.0
    %1322 = vmatprep.subr.mxu0 0.0
    %1323 = vmatpush2.msra.mxu0 0.0
    %1324 = vmatprep.subr.mxu0 0.0
    %1325 = vmatpush2.msra.mxu0 0.0
    %1326 = vmatprep.subr.mxu0 0.0
    %1327 = vmatpush2.msra.mxu0 0.0
    %1328 = vmatprep.subr.mxu0 0.0
    %1329 = vmatpush2.msra.mxu0 0.0
    %1330 = vmatprep.subr.mxu0 0.0
    %1331 = vmatpush2.msra.mxu0 0.0
    %1332 = vmatprep.subr.mxu0 0.0
    %1333 = vmatpush2.msra.mxu0 0.0
    %1334 = vmatprep.subr.mxu0 0.0
    %1335 = vmatpush2.msra.mxu0 0.0
    %1336 = vmatprep.subr.mxu0 0.0
    %1337 = vmatpush2.msra.mxu0 0.0
    %1338 = vmatprep.mubr.f32.mxu0 0.0
    %1339 = vmatmul.mubr.f32.gmra.mxu0 %v1202
    %v1340 = vpop.f32.mrf.mxu0
    %v1341 = vadd.f32 0.0, %v1340
    %v1342 = vpop.f32.mrf.mxu0
    %v1343 = vadd.f32 0.0, %v1342
    %1344 = vdwg.mxu0
    %v1345 = vadd.f32 %v1270, %v281
    %v1346 = vadd.f32 %v1272, %v285
    %v1347 = vxor.u32 %v1345, 2147483648
    %v1348 = vxor.u32 %v1346, 2147483648
    %v1349 = vmul.f32 %v1347, 1.442695
    %v1350 = vpow.pop %v1349
    %v1351 = vmul.f32 %v1348, 1.442695
    %v1352 = vpow.pop %v1351
    %v1353 = vadd.f32 %v1350, 1.0
    %v1354 = vadd.f32 %v1352, 1.0
    %v1355 = vrcp.pop %v1353
    %v1356 = vmul.f32 1.0, %v1355
    %v1357 = vrcp.pop %v1354
    %v1358 = vmul.f32 1.0, %v1357
    %v1359 = vmul.f32 %v1356, %v272
    %v1360 = vmul.f32 %v1358, %v273
    %v1361 = vadd.f32 %v1359, %v274
    %v1362 = vadd.f32 %v1360, %v275
    %v1363 = vmul.f32 %v1361, %v1165
    %v1364 = vmul.f32 %v1361, %v1362
    %1366 = vrot.lane.b32.xlu0 %v1364, 64
    %v1367 = vpop.permute.xlu0 %1366
    %v1369 = vadd.f32 %v1363, %v1367
    %v1370 = vtanh.pop %v1369
    %v1371 = vmul.f32 %v1362, %v1370
    %s1372 = scalar_lea.vmem [#allocation2], 80
    %v1373 = vld [vmem:[%s1372] sm:$0xff]
    %v1374 = vld [vmem:[%s1372 + $0x8] sm:$0xff]
    %v1375 = vadd.f32 %v1373, %v1341
    %v1376 = vadd.f32 %v1374, %v1343
    %v1377 = vxor.u32 %v1375, 2147483648
    %v1378 = vxor.u32 %v1376, 2147483648
    %v1379 = vmul.f32 %v1377, 1.442695
    %v1380 = vpow.pop %v1379
    %v1381 = vmul.f32 %v1378, 1.442695
    %v1382 = vpow.pop %v1381
    %v1383 = vadd.f32 %v1380, 1.0
    %v1384 = vadd.f32 %v1382, 1.0
    %v1385 = vrcp.pop %v1383
    %v1386 = vmul.f32 1.0, %v1385
    %v1387 = vrcp.pop %v1384
    %v1388 = vmul.f32 1.0, %v1387
    %v1389 = vmul.f32 %v1386, %v272
    %v1390 = vmul.f32 %v1388, %v273
    %v1391 = vadd.f32 %v1389, %v274
    %v1392 = vadd.f32 %v1390, %v275
    %v1393 = vmul.f32 %v1391, %v1195
    %v1394 = vmul.f32 %v1391, %v1392
    %1396 = vrot.lane.b32.xlu0 %v1394, 64
    %v1397 = vpop.permute.xlu0 %1396
    %v1399 = vadd.f32 %v1393, %v1397
    %v1400 = vtanh.pop %v1399
    %v1401 = vmul.f32 %v1392, %v1400
    %1403 = vrot.lane.b32.xlu0 %v1401, 64
    %v1404 = vpop.permute.xlu0 %1403
    %v1406 = vsel %vm321, %v1404, %v1371
    %1407 = vmatprep.subr.mxu0 %v384
    %1408 = vmatpush1.msra.mxu0 %v383
    %1409 = vmatprep.subr.mxu0 %v380
    %1410 = vmatpush1.msra.mxu0 %v379
    %1411 = vmatprep.subr.mxu0 %v376
    %1412 = vmatpush1.msra.mxu0 %v375
    %1413 = vmatprep.subr.mxu0 %v372
    %1414 = vmatpush1.msra.mxu0 %v371
    %1415 = vmatprep.subr.mxu0 %v368
    %1416 = vmatpush1.msra.mxu0 %v367
    %1417 = vmatprep.subr.mxu0 %v364
    %1418 = vmatpush1.msra.mxu0 %v363
    %1419 = vmatprep.subr.mxu0 %v360
    %1420 = vmatpush1.msra.mxu0 %v359
    %1421 = vmatprep.subr.mxu0 %v356
    %1422 = vmatpush1.msra.mxu0 %v355
    %1423 = vmatprep.subr.mxu0 %v352
    %1424 = vmatpush1.msra.mxu0 %v351
    %1425 = vmatprep.subr.mxu0 %v348
    %1426 = vmatpush1.msra.mxu0 %v347
    %1427 = vmatprep.subr.mxu0 %v344
    %1428 = vmatpush1.msra.mxu0 %v343
    %1429 = vmatprep.subr.mxu0 %v340
    %1430 = vmatpush1.msra.mxu0 %v339
    %1431 = vmatprep.subr.mxu0 %v336
    %1432 = vmatpush1.msra.mxu0 %v335
    %1433 = vmatprep.subr.mxu0 %v332
    %1434 = vmatpush1.msra.mxu0 %v331
    %1435 = vmatprep.subr.mxu0 %v328
    %1436 = vmatpush1.msra.mxu0 %v327
    %1437 = vmatprep.subr.mxu0 %v324
    %1438 = vmatpush1.msra.mxu0 %v323
    %1439 = vmatprep.subr.mxu0 0.0
    %1440 = vmatpush2.msra.mxu0 0.0
    %1441 = vmatprep.subr.mxu0 0.0
    %1442 = vmatpush2.msra.mxu0 0.0
    %1443 = vmatprep.subr.mxu0 0.0
    %1444 = vmatpush2.msra.mxu0 0.0
    %1445 = vmatprep.subr.mxu0 0.0
    %1446 = vmatpush2.msra.mxu0 0.0
    %1447 = vmatprep.subr.mxu0 0.0
    %1448 = vmatpush2.msra.mxu0 0.0
    %1449 = vmatprep.subr.mxu0 0.0
    %1450 = vmatpush2.msra.mxu0 0.0
    %1451 = vmatprep.subr.mxu0 0.0
    %1452 = vmatpush2.msra.mxu0 0.0
    %1453 = vmatprep.subr.mxu0 0.0
    %1454 = vmatpush2.msra.mxu0 0.0
    %1455 = vmatprep.subr.mxu0 0.0
    %1456 = vmatpush2.msra.mxu0 0.0
    %1457 = vmatprep.subr.mxu0 0.0
    %1458 = vmatpush2.msra.mxu0 0.0
    %1459 = vmatprep.subr.mxu0 0.0
    %1460 = vmatpush2.msra.mxu0 0.0
    %1461 = vmatprep.subr.mxu0 0.0
    %1462 = vmatpush2.msra.mxu0 0.0
    %1463 = vmatprep.subr.mxu0 0.0
    %1464 = vmatpush2.msra.mxu0 0.0
    %1465 = vmatprep.subr.mxu0 0.0
    %1466 = vmatpush2.msra.mxu0 0.0
    %1467 = vmatprep.subr.mxu0 0.0
    %1468 = vmatpush2.msra.mxu0 0.0
    %1469 = vmatprep.subr.mxu0 0.0
    %1470 = vmatpush2.msra.mxu0 0.0
    %1471 = vmatprep.mubr.f32.mxu0 0.0
    %1472 = vmatmul.mubr.f32.gmra.mxu0 %v1406
    %v1473 = vpop.f32.mrf.mxu0
    %v1474 = vadd.f32 0.0, %v1473
    %v1475 = vpop.f32.mrf.mxu0
    %v1476 = vadd.f32 0.0, %v1475
    %1477 = vdwg.mxu0
    %1478 = vmatprep.subr.mxu0 %v386
    %1479 = vmatpush1.msra.mxu0 %v385
    %1480 = vmatprep.subr.mxu0 %v382
    %1481 = vmatpush1.msra.mxu0 %v381
    %1482 = vmatprep.subr.mxu0 %v378
    %1483 = vmatpush1.msra.mxu0 %v377
    %1484 = vmatprep.subr.mxu0 %v374
    %1485 = vmatpush1.msra.mxu0 %v373
    %1486 = vmatprep.subr.mxu0 %v370
    %1487 = vmatpush1.msra.mxu0 %v369
    %1488 = vmatprep.subr.mxu0 %v366
    %1489 = vmatpush1.msra.mxu0 %v365
    %1490 = vmatprep.subr.mxu0 %v362
    %1491 = vmatpush1.msra.mxu0 %v361
    %1492 = vmatprep.subr.mxu0 %v358
    %1493 = vmatpush1.msra.mxu0 %v357
    %1494 = vmatprep.subr.mxu0 %v354
    %1495 = vmatpush1.msra.mxu0 %v353
    %1496 = vmatprep.subr.mxu0 %v350
    %1497 = vmatpush1.msra.mxu0 %v349
    %1498 = vmatprep.subr.mxu0 %v346
    %1499 = vmatpush1.msra.mxu0 %v345
    %1500 = vmatprep.subr.mxu0 %v342
    %1501 = vmatpush1.msra.mxu0 %v341
    %1502 = vmatprep.subr.mxu0 %v338
    %1503 = vmatpush1.msra.mxu0 %v337
    %1504 = vmatprep.subr.mxu0 %v334
    %1505 = vmatpush1.msra.mxu0 %v333
    %1506 = vmatprep.subr.mxu0 %v330
    %1507 = vmatpush1.msra.mxu0 %v329
    %1508 = vmatprep.subr.mxu0 %v326
    %1509 = vmatpush1.msra.mxu0 %v325
    %1510 = vmatprep.subr.mxu0 0.0
    %1511 = vmatpush2.msra.mxu0 0.0
    %1512 = vmatprep.subr.mxu0 0.0
    %1513 = vmatpush2.msra.mxu0 0.0
    %1514 = vmatprep.subr.mxu0 0.0
    %1515 = vmatpush2.msra.mxu0 0.0
    %1516 = vmatprep.subr.mxu0 0.0
    %1517 = vmatpush2.msra.mxu0 0.0
    %1518 = vmatprep.subr.mxu0 0.0
    %1519 = vmatpush2.msra.mxu0 0.0
    %1520 = vmatprep.subr.mxu0 0.0
    %1521 = vmatpush2.msra.mxu0 0.0
    %1522 = vmatprep.subr.mxu0 0.0
    %1523 = vmatpush2.msra.mxu0 0.0
    %1524 = vmatprep.subr.mxu0 0.0
    %1525 = vmatpush2.msra.mxu0 0.0
    %1526 = vmatprep.subr.mxu0 0.0
    %1527 = vmatpush2.msra.mxu0 0.0
    %1528 = vmatprep.subr.mxu0 0.0
    %1529 = vmatpush2.msra.mxu0 0.0
    %1530 = vmatprep.subr.mxu0 0.0
    %1531 = vmatpush2.msra.mxu0 0.0
    %1532 = vmatprep.subr.mxu0 0.0
    %1533 = vmatpush2.msra.mxu0 0.0
    %1534 = vmatprep.subr.mxu0 0.0
    %1535 = vmatpush2.msra.mxu0 0.0
    %1536 = vmatprep.subr.mxu0 0.0
    %1537 = vmatpush2.msra.mxu0 0.0
    %1538 = vmatprep.subr.mxu0 0.0
    %1539 = vmatpush2.msra.mxu0 0.0
    %1540 = vmatprep.subr.mxu0 0.0
    %1541 = vmatpush2.msra.mxu0 0.0
    %1542 = vmatprep.mubr.f32.mxu0 0.0
    %1543 = vmatmul.mubr.f32.gmra.mxu0 %v1406
    %v1544 = vpop.f32.mrf.mxu0
    %v1545 = vadd.f32 0.0, %v1544
    %v1546 = vpop.f32.mrf.mxu0
    %v1547 = vadd.f32 0.0, %v1546
    %1548 = vdwg.mxu0
    %v1549 = vadd.f32 %v1474, %v281
    %v1550 = vadd.f32 %v1476, %v285
    %v1551 = vxor.u32 %v1549, 2147483648
    %v1552 = vxor.u32 %v1550, 2147483648
    %v1553 = vmul.f32 %v1551, 1.442695
    %v1554 = vpow.pop %v1553
    %v1555 = vmul.f32 %v1552, 1.442695
    %v1556 = vpow.pop %v1555
    %v1557 = vadd.f32 %v1554, 1.0
    %v1558 = vadd.f32 %v1556, 1.0
    %v1559 = vrcp.pop %v1557
    %v1560 = vmul.f32 1.0, %v1559
    %v1561 = vrcp.pop %v1558
    %v1562 = vmul.f32 1.0, %v1561
    %v1563 = vmul.f32 %v1560, %v272
    %v1564 = vmul.f32 %v1562, %v273
    %v1565 = vadd.f32 %v1563, %v274
    %v1566 = vadd.f32 %v1564, %v275
    %v1567 = vmul.f32 %v1565, %v1369
    %v1568 = vmul.f32 %v1565, %v1566
    %1570 = vrot.lane.b32.xlu0 %v1568, 64
    %v1571 = vpop.permute.xlu0 %1570
    %v1573 = vadd.f32 %v1567, %v1571
    %v1574 = vtanh.pop %v1573
    %v1575 = vmul.f32 %v1566, %v1574
    %s1576 = scalar_lea.vmem [#allocation2], 96
    %v1577 = vld [vmem:[%s1576] sm:$0xff]
    %v1578 = vld [vmem:[%s1576 + $0x8] sm:$0xff]
    %v1579 = vadd.f32 %v1577, %v1545
    %v1580 = vadd.f32 %v1578, %v1547
    %v1581 = vxor.u32 %v1579, 2147483648
    %v1582 = vxor.u32 %v1580, 2147483648
    %v1583 = vmul.f32 %v1581, 1.442695
    %v1584 = vpow.pop %v1583
    %v1585 = vmul.f32 %v1582, 1.442695
    %v1586 = vpow.pop %v1585
    %v1587 = vadd.f32 %v1584, 1.0
    %v1588 = vadd.f32 %v1586, 1.0
    %v1589 = vrcp.pop %v1587
    %v1590 = vmul.f32 1.0, %v1589
    %v1591 = vrcp.pop %v1588
    %v1592 = vmul.f32 1.0, %v1591
    %v1593 = vmul.f32 %v1590, %v272
    %v1594 = vmul.f32 %v1592, %v273
    %v1595 = vadd.f32 %v1593, %v274
    %v1596 = vadd.f32 %v1594, %v275
    %v1597 = vmul.f32 %v1595, %v1399
    %v1598 = vmul.f32 %v1595, %v1596
    %1600 = vrot.lane.b32.xlu0 %v1598, 64
    %v1601 = vpop.permute.xlu0 %1600
    %v1603 = vadd.f32 %v1597, %v1601
    %v1604 = vtanh.pop %v1603
    %v1605 = vmul.f32 %v1596, %v1604
    %1607 = vrot.lane.b32.xlu0 %v1605, 64
    %v1608 = vpop.permute.xlu0 %1607
    %v1610 = vsel %vm321, %v1608, %v1575
    %1611 = vmatprep.subr.mxu0 %v384
    %1612 = vmatpush1.msra.mxu0 %v383
    %1613 = vmatprep.subr.mxu0 %v380
    %1614 = vmatpush1.msra.mxu0 %v379
    %1615 = vmatprep.subr.mxu0 %v376
    %1616 = vmatpush1.msra.mxu0 %v375
    %1617 = vmatprep.subr.mxu0 %v372
    %1618 = vmatpush1.msra.mxu0 %v371
    %1619 = vmatprep.subr.mxu0 %v368
    %1620 = vmatpush1.msra.mxu0 %v367
    %1621 = vmatprep.subr.mxu0 %v364
    %1622 = vmatpush1.msra.mxu0 %v363
    %1623 = vmatprep.subr.mxu0 %v360
    %1624 = vmatpush1.msra.mxu0 %v359
    %1625 = vmatprep.subr.mxu0 %v356
    %1626 = vmatpush1.msra.mxu0 %v355
    %1627 = vmatprep.subr.mxu0 %v352
    %1628 = vmatpush1.msra.mxu0 %v351
    %1629 = vmatprep.subr.mxu0 %v348
    %1630 = vmatpush1.msra.mxu0 %v347
    %1631 = vmatprep.subr.mxu0 %v344
    %1632 = vmatpush1.msra.mxu0 %v343
    %1633 = vmatprep.subr.mxu0 %v340
    %1634 = vmatpush1.msra.mxu0 %v339
    %1635 = vmatprep.subr.mxu0 %v336
    %1636 = vmatpush1.msra.mxu0 %v335
    %1637 = vmatprep.subr.mxu0 %v332
    %1638 = vmatpush1.msra.mxu0 %v331
    %1639 = vmatprep.subr.mxu0 %v328
    %1640 = vmatpush1.msra.mxu0 %v327
    %1641 = vmatprep.subr.mxu0 %v324
    %1642 = vmatpush1.msra.mxu0 %v323
    %1643 = vmatprep.subr.mxu0 0.0
    %1644 = vmatpush2.msra.mxu0 0.0
    %1645 = vmatprep.subr.mxu0 0.0
    %1646 = vmatpush2.msra.mxu0 0.0
    %1647 = vmatprep.subr.mxu0 0.0
    %1648 = vmatpush2.msra.mxu0 0.0
    %1649 = vmatprep.subr.mxu0 0.0
    %1650 = vmatpush2.msra.mxu0 0.0
    %1651 = vmatprep.subr.mxu0 0.0
    %1652 = vmatpush2.msra.mxu0 0.0
    %1653 = vmatprep.subr.mxu0 0.0
    %1654 = vmatpush2.msra.mxu0 0.0
    %1655 = vmatprep.subr.mxu0 0.0
    %1656 = vmatpush2.msra.mxu0 0.0
    %1657 = vmatprep.subr.mxu0 0.0
    %1658 = vmatpush2.msra.mxu0 0.0
    %1659 = vmatprep.subr.mxu0 0.0
    %1660 = vmatpush2.msra.mxu0 0.0
    %1661 = vmatprep.subr.mxu0 0.0
    %1662 = vmatpush2.msra.mxu0 0.0
    %1663 = vmatprep.subr.mxu0 0.0
    %1664 = vmatpush2.msra.mxu0 0.0
    %1665 = vmatprep.subr.mxu0 0.0
    %1666 = vmatpush2.msra.mxu0 0.0
    %1667 = vmatprep.subr.mxu0 0.0
    %1668 = vmatpush2.msra.mxu0 0.0
    %1669 = vmatprep.subr.mxu0 0.0
    %1670 = vmatpush2.msra.mxu0 0.0
    %1671 = vmatprep.subr.mxu0 0.0
    %1672 = vmatpush2.msra.mxu0 0.0
    %1673 = vmatprep.subr.mxu0 0.0
    %1674 = vmatpush2.msra.mxu0 0.0
    %1675 = vmatprep.mubr.f32.mxu0 0.0
    %1676 = vmatmul.mubr.f32.gmra.mxu0 %v1610
    %v1677 = vpop.f32.mrf.mxu0
    %v1678 = vadd.f32 0.0, %v1677
    %v1679 = vpop.f32.mrf.mxu0
    %v1680 = vadd.f32 0.0, %v1679
    %1681 = vdwg.mxu0
    %1682 = vmatprep.subr.mxu0 %v386
    %1683 = vmatpush1.msra.mxu0 %v385
    %1684 = vmatprep.subr.mxu0 %v382
    %1685 = vmatpush1.msra.mxu0 %v381
    %1686 = vmatprep.subr.mxu0 %v378
    %1687 = vmatpush1.msra.mxu0 %v377
    %1688 = vmatprep.subr.mxu0 %v374
    %1689 = vmatpush1.msra.mxu0 %v373
    %1690 = vmatprep.subr.mxu0 %v370
    %1691 = vmatpush1.msra.mxu0 %v369
    %1692 = vmatprep.subr.mxu0 %v366
    %1693 = vmatpush1.msra.mxu0 %v365
    %1694 = vmatprep.subr.mxu0 %v362
    %1695 = vmatpush1.msra.mxu0 %v361
    %1696 = vmatprep.subr.mxu0 %v358
    %1697 = vmatpush1.msra.mxu0 %v357
    %1698 = vmatprep.subr.mxu0 %v354
    %1699 = vmatpush1.msra.mxu0 %v353
    %1700 = vmatprep.subr.mxu0 %v350
    %1701 = vmatpush1.msra.mxu0 %v349
    %1702 = vmatprep.subr.mxu0 %v346
    %1703 = vmatpush1.msra.mxu0 %v345
    %1704 = vmatprep.subr.mxu0 %v342
    %1705 = vmatpush1.msra.mxu0 %v341
    %1706 = vmatprep.subr.mxu0 %v338
    %1707 = vmatpush1.msra.mxu0 %v337
    %1708 = vmatprep.subr.mxu0 %v334
    %1709 = vmatpush1.msra.mxu0 %v333
    %1710 = vmatprep.subr.mxu0 %v330
    %1711 = vmatpush1.msra.mxu0 %v329
    %1712 = vmatprep.subr.mxu0 %v326
    %1713 = vmatpush1.msra.mxu0 %v325
    %1714 = vmatprep.subr.mxu0 0.0
    %1715 = vmatpush2.msra.mxu0 0.0
    %1716 = vmatprep.subr.mxu0 0.0
    %1717 = vmatpush2.msra.mxu0 0.0
    %1718 = vmatprep.subr.mxu0 0.0
    %1719 = vmatpush2.msra.mxu0 0.0
    %1720 = vmatprep.subr.mxu0 0.0
    %1721 = vmatpush2.msra.mxu0 0.0
    %1722 = vmatprep.subr.mxu0 0.0
    %1723 = vmatpush2.msra.mxu0 0.0
    %1724 = vmatprep.subr.mxu0 0.0
    %1725 = vmatpush2.msra.mxu0 0.0
    %1726 = vmatprep.subr.mxu0 0.0
    %1727 = vmatpush2.msra.mxu0 0.0
    %1728 = vmatprep.subr.mxu0 0.0
    %1729 = vmatpush2.msra.mxu0 0.0
    %1730 = vmatprep.subr.mxu0 0.0
    %1731 = vmatpush2.msra.mxu0 0.0
    %1732 = vmatprep.subr.mxu0 0.0
    %1733 = vmatpush2.msra.mxu0 0.0
    %1734 = vmatprep.subr.mxu0 0.0
    %1735 = vmatpush2.msra.mxu0 0.0
    %1736 = vmatprep.subr.mxu0 0.0
    %1737 = vmatpush2.msra.mxu0 0.0
    %1738 = vmatprep.subr.mxu0 0.0
    %1739 = vmatpush2.msra.mxu0 0.0
    %1740 = vmatprep.subr.mxu0 0.0
    %1741 = vmatpush2.msra.mxu0 0.0
    %1742 = vmatprep.subr.mxu0 0.0
    %1743 = vmatpush2.msra.mxu0 0.0
    %1744 = vmatprep.subr.mxu0 0.0
    %1745 = vmatpush2.msra.mxu0 0.0
    %1746 = vmatprep.mubr.f32.mxu0 0.0
    %1747 = vmatmul.mubr.f32.gmra.mxu0 %v1610
    %v1748 = vpop.f32.mrf.mxu0
    %v1749 = vadd.f32 0.0, %v1748
    %v1750 = vpop.f32.mrf.mxu0
    %v1751 = vadd.f32 0.0, %v1750
    %1752 = vdwg.mxu0
    %v1753 = vadd.f32 %v1678, %v281
    %v1754 = vadd.f32 %v1680, %v285
    %v1755 = vxor.u32 %v1753, 2147483648
    %v1756 = vxor.u32 %v1754, 2147483648
    %v1757 = vmul.f32 %v1755, 1.442695
    %v1758 = vpow.pop %v1757
    %v1759 = vmul.f32 %v1756, 1.442695
    %v1760 = vpow.pop %v1759
    %v1761 = vadd.f32 %v1758, 1.0
    %v1762 = vadd.f32 %v1760, 1.0
    %v1763 = vrcp.pop %v1761
    %v1764 = vmul.f32 1.0, %v1763
    %v1765 = vrcp.pop %v1762
    %v1766 = vmul.f32 1.0, %v1765
    %v1767 = vmul.f32 %v1764, %v272
    %v1768 = vmul.f32 %v1766, %v273
    %v1769 = vadd.f32 %v1767, %v274
    %v1770 = vadd.f32 %v1768, %v275
    %v1771 = vmul.f32 %v1769, %v1573
    %v1772 = vmul.f32 %v1769, %v1770
    %1774 = vrot.lane.b32.xlu0 %v1772, 64
    %v1775 = vpop.permute.xlu0 %1774
    %v1777 = vadd.f32 %v1771, %v1775
    %v1778 = vtanh.pop %v1777
    %v1779 = vmul.f32 %v1770, %v1778
    %s1780 = scalar_lea.vmem [#allocation2], 112
    %v1781 = vld [vmem:[%s1780] sm:$0xff]
    %v1782 = vld [vmem:[%s1780 + $0x8] sm:$0xff]
    %v1783 = vadd.f32 %v1781, %v1749
    %v1784 = vadd.f32 %v1782, %v1751
    %v1785 = vxor.u32 %v1783, 2147483648
    %v1786 = vxor.u32 %v1784, 2147483648
    %v1787 = vmul.f32 %v1785, 1.442695
    %v1788 = vpow.pop %v1787
    %v1789 = vmul.f32 %v1786, 1.442695
    %v1790 = vpow.pop %v1789
    %v1791 = vadd.f32 %v1788, 1.0
    %v1792 = vadd.f32 %v1790, 1.0
    %v1793 = vrcp.pop %v1791
    %v1794 = vmul.f32 1.0, %v1793
    %v1795 = vrcp.pop %v1792
    %v1796 = vmul.f32 1.0, %v1795
    %v1797 = vmul.f32 %v1794, %v272
    %v1798 = vmul.f32 %v1796, %v273
    %v1799 = vadd.f32 %v1797, %v274
    %v1800 = vadd.f32 %v1798, %v275
    %v1801 = vmul.f32 %v1799, %v1603
    %v1802 = vmul.f32 %v1799, %v1800
    %1804 = vrot.lane.b32.xlu0 %v1802, 64
    %v1805 = vpop.permute.xlu0 %1804
    %v1807 = vadd.f32 %v1801, %v1805
    %v1808 = vtanh.pop %v1807
    %v1809 = vmul.f32 %v1800, %v1808
    %1811 = vrot.lane.b32.xlu0 %v1809, 64
    %v1812 = vpop.permute.xlu0 %1811
    %v1814 = vsel %vm321, %v1812, %v1779
    %1815 = vmatprep.subr.mxu0 %v384
    %1816 = vmatpush1.msra.mxu0 %v383
    %1817 = vmatprep.subr.mxu0 %v380
    %1818 = vmatpush1.msra.mxu0 %v379
    %1819 = vmatprep.subr.mxu0 %v376
    %1820 = vmatpush1.msra.mxu0 %v375
    %1821 = vmatprep.subr.mxu0 %v372
    %1822 = vmatpush1.msra.mxu0 %v371
    %1823 = vmatprep.subr.mxu0 %v368
    %1824 = vmatpush1.msra.mxu0 %v367
    %1825 = vmatprep.subr.mxu0 %v364
    %1826 = vmatpush1.msra.mxu0 %v363
    %1827 = vmatprep.subr.mxu0 %v360
    %1828 = vmatpush1.msra.mxu0 %v359
    %1829 = vmatprep.subr.mxu0 %v356
    %1830 = vmatpush1.msra.mxu0 %v355
    %1831 = vmatprep.subr.mxu0 %v352
    %1832 = vmatpush1.msra.mxu0 %v351
    %1833 = vmatprep.subr.mxu0 %v348
    %1834 = vmatpush1.msra.mxu0 %v347
    %1835 = vmatprep.subr.mxu0 %v344
    %1836 = vmatpush1.msra.mxu0 %v343
    %1837 = vmatprep.subr.mxu0 %v340
    %1838 = vmatpush1.msra.mxu0 %v339
    %1839 = vmatprep.subr.mxu0 %v336
    %1840 = vmatpush1.msra.mxu0 %v335
    %1841 = vmatprep.subr.mxu0 %v332
    %1842 = vmatpush1.msra.mxu0 %v331
    %1843 = vmatprep.subr.mxu0 %v328
    %1844 = vmatpush1.msra.mxu0 %v327
    %1845 = vmatprep.subr.mxu0 %v324
    %1846 = vmatpush1.msra.mxu0 %v323
    %1847 = vmatprep.subr.mxu0 0.0
    %1848 = vmatpush2.msra.mxu0 0.0
    %1849 = vmatprep.subr.mxu0 0.0
    %1850 = vmatpush2.msra.mxu0 0.0
    %1851 = vmatprep.subr.mxu0 0.0
    %1852 = vmatpush2.msra.mxu0 0.0
    %1853 = vmatprep.subr.mxu0 0.0
    %1854 = vmatpush2.msra.mxu0 0.0
    %1855 = vmatprep.subr.mxu0 0.0
    %1856 = vmatpush2.msra.mxu0 0.0
    %1857 = vmatprep.subr.mxu0 0.0
    %1858 = vmatpush2.msra.mxu0 0.0
    %1859 = vmatprep.subr.mxu0 0.0
    %1860 = vmatpush2.msra.mxu0 0.0
    %1861 = vmatprep.subr.mxu0 0.0
    %1862 = vmatpush2.msra.mxu0 0.0
    %1863 = vmatprep.subr.mxu0 0.0
    %1864 = vmatpush2.msra.mxu0 0.0
    %1865 = vmatprep.subr.mxu0 0.0
    %1866 = vmatpush2.msra.mxu0 0.0
    %1867 = vmatprep.subr.mxu0 0.0
    %1868 = vmatpush2.msra.mxu0 0.0
    %1869 = vmatprep.subr.mxu0 0.0
    %1870 = vmatpush2.msra.mxu0 0.0
    %1871 = vmatprep.subr.mxu0 0.0
    %1872 = vmatpush2.msra.mxu0 0.0
    %1873 = vmatprep.subr.mxu0 0.0
    %1874 = vmatpush2.msra.mxu0 0.0
    %1875 = vmatprep.subr.mxu0 0.0
    %1876 = vmatpush2.msra.mxu0 0.0
    %1877 = vmatprep.subr.mxu0 0.0
    %1878 = vmatpush2.msra.mxu0 0.0
    %1879 = vmatprep.mubr.f32.mxu0 0.0
    %1880 = vmatmul.mubr.f32.gmra.mxu0 %v1814
    %v1881 = vpop.f32.mrf.mxu0
    %v1882 = vadd.f32 0.0, %v1881
    %v1883 = vpop.f32.mrf.mxu0
    %v1884 = vadd.f32 0.0, %v1883
    %1885 = vdwg.mxu0
    %v1886 = vadd.f32 %v1882, %v281
    %v1887 = vadd.f32 %v1884, %v285
    %v1888 = vxor.u32 %v1886, 2147483648
    %v1889 = vxor.u32 %v1887, 2147483648
    %v1890 = vmul.f32 %v1888, 1.442695
    %v1891 = vpow.pop %v1890
    %v1892 = vmul.f32 %v1889, 1.442695
    %v1893 = vpow.pop %v1892
    %v1894 = vadd.f32 %v1891, 1.0
    %v1895 = vadd.f32 %v1893, 1.0
    %v1896 = vrcp.pop %v1894
    %v1897 = vmul.f32 1.0, %v1896
    %v1898 = vrcp.pop %v1895
    %v1899 = vmul.f32 1.0, %v1898
    %v1900 = vmul.f32 %v1897, %v272
    %v1901 = vmul.f32 %v1899, %v273
    %v1902 = vadd.f32 %v1900, %v274
    %v1903 = vadd.f32 %v1901, %v275
    %v1904 = vmul.f32 %v1902, %v1777
    %v1905 = vmul.f32 %v1902, %v1903
    %1907 = vrot.lane.b32.xlu0 %v1905, 64
    %v1908 = vpop.permute.xlu0 %1907
    %v1910 = vadd.f32 %v1904, %v1908
    %v1911 = vtanh.pop %v1910
    %v1912 = vmul.f32 %v1903, %v1911
    %v1913 = vld [vmem:[#allocation9] sm:$0xff]
    %v1914 = vld [vmem:[#allocation9 + $0x8] sm:$0xff]
    %v1915 = vld [vmem:[#allocation9 + $0x10] sm:$0xff]
    %v1916 = vld [vmem:[#allocation9 + $0x18] sm:$0xff]
    %v1917 = vld [vmem:[#allocation9 + $0x20] sm:$0xff]
    %v1918 = vld [vmem:[#allocation9 + $0x28] sm:$0xff]
    %v1919 = vld [vmem:[#allocation9 + $0x30] sm:$0xff]
    %v1920 = vld [vmem:[#allocation9 + $0x38] sm:$0xff]
    %v1921 = vld [vmem:[%s6] sm:$0x1]
    %v1923 = vlaneseq
    %v1924 = vshrl.u32 %v1923, 7
    %v1925 = vsub.s32 0, %v1924
    %v1926 = vrot.slane %v1921, %v1925
    %1929 = vrot.lane.b32.xlu0 %v1912, 64
    %v1930 = vpop.permute.xlu0 %1929
    %v1931 = vsel %vm321, %v1930, 0
    %1933 = vmatprep.subr.mxu0 0.0
    %1934 = vmatpush1.msra.mxu0 0.0
    %1935 = vmatprep.subr.mxu0 0.0
    %1936 = vmatpush1.msra.mxu0 0.0
    %1937 = vmatprep.subr.mxu0 0.0
    %1938 = vmatpush1.msra.mxu0 0.0
    %1939 = vmatprep.subr.mxu0 0.0
    %1940 = vmatpush1.msra.mxu0 0.0
    %1941 = vmatprep.subr.mxu0 0.0
    %1942 = vmatpush1.msra.mxu0 0.0
    %1943 = vmatprep.subr.mxu0 0.0
    %1944 = vmatpush1.msra.mxu0 0.0
    %1945 = vmatprep.subr.mxu0 0.0
    %1946 = vmatpush1.msra.mxu0 0.0
    %1947 = vmatprep.subr.mxu0 0.0
    %1948 = vmatpush1.msra.mxu0 0.0
    %1949 = vmatprep.subr.mxu0 0.0
    %1950 = vmatpush1.msra.mxu0 %v1920
    %1951 = vmatprep.subr.mxu0 0.0
    %1952 = vmatpush1.msra.mxu0 %v1919
    %1953 = vmatprep.subr.mxu0 0.0
    %1954 = vmatpush1.msra.mxu0 %v1918
    %1955 = vmatprep.subr.mxu0 0.0
    %1956 = vmatpush1.msra.mxu0 %v1917
    %1957 = vmatprep.subr.mxu0 0.0
    %1958 = vmatpush1.msra.mxu0 %v1916
    %1959 = vmatprep.subr.mxu0 0.0
    %1960 = vmatpush1.msra.mxu0 %v1915
    %1961 = vmatprep.subr.mxu0 0.0
    %1962 = vmatpush1.msra.mxu0 %v1914
    %1963 = vmatprep.subr.mxu0 0.0
    %1964 = vmatpush1.msra.mxu0 %v1913
    %1965 = vmatprep.subr.mxu0 0.0
    %1966 = vmatpush2.msra.mxu0 0.0
    %1967 = vmatprep.subr.mxu0 0.0
    %1968 = vmatpush2.msra.mxu0 0.0
    %1969 = vmatprep.subr.mxu0 0.0
    %1970 = vmatpush2.msra.mxu0 0.0
    %1971 = vmatprep.subr.mxu0 0.0
    %1972 = vmatpush2.msra.mxu0 0.0
    %1973 = vmatprep.subr.mxu0 0.0
    %1974 = vmatpush2.msra.mxu0 0.0
    %1975 = vmatprep.subr.mxu0 0.0
    %1976 = vmatpush2.msra.mxu0 0.0
    %1977 = vmatprep.subr.mxu0 0.0
    %1978 = vmatpush2.msra.mxu0 0.0
    %1979 = vmatprep.subr.mxu0 0.0
    %1980 = vmatpush2.msra.mxu0 0.0
    %1981 = vmatprep.subr.mxu0 0.0
    %1982 = vmatpush2.msra.mxu0 0.0
    %1983 = vmatprep.subr.mxu0 0.0
    %1984 = vmatpush2.msra.mxu0 0.0
    %1985 = vmatprep.subr.mxu0 0.0
    %1986 = vmatpush2.msra.mxu0 0.0
    %1987 = vmatprep.subr.mxu0 0.0
    %1988 = vmatpush2.msra.mxu0 0.0
    %1989 = vmatprep.subr.mxu0 0.0
    %1990 = vmatpush2.msra.mxu0 0.0
    %1991 = vmatprep.subr.mxu0 0.0
    %1992 = vmatpush2.msra.mxu0 0.0
    %1993 = vmatprep.subr.mxu0 0.0
    %1994 = vmatpush2.msra.mxu0 0.0
    %1995 = vmatprep.subr.mxu0 0.0
    %1996 = vmatpush2.msra.mxu0 0.0
    %1997 = vmatprep.mubr.f32.mxu0 0.0
    %1998 = vmatmul.mubr.f32.gmra.mxu0 %v1931
    %v1999 = vpop.f32.mrf.mxu0
    %v2000 = vadd.f32 %v1926, %v1999
    %v2001 = vpop.f32.mrf.mxu0
    %2002 = vdwg.mxu0
    %2003 = vst [vmem:[#allocation11] sm:$0xff] %v2000
    // Predicated region
    $region46: #{tpu_custom_call.1} parent=1 // pred_check
      _
    $region47: #{tpu_custom_call.1} parent=1 // pred_check_branch
      %2005 = sbr.rel (0) target = $region49
    $region48: #{tpu_custom_call.1} parent=1 // pred_region
      %s2007 = ssub.s32 128, 128
      %2008 = vsyncadd [#allocation5], %s2007
      %s2010 = sshll.u32 [#allocation11], 4
      %s2011 = int_to_ptr.vmem [resolvable:$true] %s2010
      %2013 = dma.vmem_to_hbm [thread:$0]  %s2011, 128, %s7, [#allocation5]
    $region49: #{tpu_custom_call.1} parent=1 // pred_fallthru
      _
    // Predicated region
    $region50: #{tpu_custom_call.1} parent=1 // pred_check
      _
    $region51: #{tpu_custom_call.1} parent=1 // pred_check_branch
      %2015 = sbr.rel (0) target = $region53
    $region52: #{tpu_custom_call.1} parent=1 // pred_region
      %2016 = dma.done [#allocation5], 128
    $region53: #{tpu_custom_call.1} parent=1 // pred_fallthru
      _
    %2017 = vsyncpa [#allocation4], 1
    %2018 = vsyncpa [#allocation7], 1
    %2019 = vsyncpa [#allocation10], 1
    %2020 = vsyncpa [#allocation5], 1

</llo_original>
